<compile_context>
chip_gen: v7x
topology: tpu7x:2x2x1
jax: 0.10.0
libtpu: 0.0.40
codegen_flags: <defaults>
</compile_context>

<pallas_src>
import jax
import jax.numpy as jnp
from jax import lax
from jax.experimental import pallas as pl
from jax.experimental.pallas import tpu as pltpu


# ----------------------------------------------------------------------------
# Fused Pallas kernel: GRU recurrence + 3 linear heads
# ----------------------------------------------------------------------------
def gru_head_kernel(x_ref, wih_ref, whh_ref, bias_ref, head_w_ref, head_b_ref,
                    out_ref):
    """Single-layer GRU (PyTorch gate order r,z,n, h0 = 0) fused with 3 heads.

    x_ref:      (B, I, T)  module input, unchanged layout (permute folded in)
    wih_ref:    (I, 3H)    fused per-gate input weights  [r | z | n]
    whh_ref:    (H, 3H)    fused per-gate recurrent weights [r | z | n]
    bias_ref:   (1, 4H)    [b_ih_r+b_hh_r | b_ih_z+b_hh_z | b_ih_n | b_hh_n]
    head_w_ref: (T*H, 3)   three Linear(T*H, 1) heads fused
    head_b_ref: (1, 3)
    out_ref:    (B, 3)
    """
    B = x_ref.shape[0]
    T = x_ref.shape[2]
    H = whh_ref.shape[0]

    x = x_ref[...]                      # (B, I, T)
    wih = wih_ref[...]                  # (I, 3H)
    whh = whh_ref[...]                  # (H, 3H)
    gi_bias = bias_ref[:, 0:3 * H]      # (1, 3H)  bias on the input projection
    b_hn = bias_ref[:, 3 * H:4 * H]     # (1, H)   recurrent n-bias, stays in r*(.)

    # ---- prologue (off the serial chain) -----------------------------------
    # Fold the permute(0,2,1) into the kernel: (B, I, T) -> (I, B*T) -> (B*T, I)
    # and do ONE fused input projection for all gates and all time steps.
    xt = jnp.concatenate([x[b] for b in range(B)], axis=1)          # (I, B*T)
    gi_all = jnp.dot(xt.T, wih,
                     preferred_element_type=jnp.float32) + gi_bias  # (B*T, 3H)

    # Per-step (B, 3H) gate inputs, extracted once before the loop. Row
    # b*T + t of gi_all is (batch b, time t); these extractions do not depend
    # on h, so the scheduler keeps them off the serial MXU chain.
    gi_steps = [
        jnp.concatenate(
            [gi_all[b * T + t:b * T + t + 1] for b in range(B)], axis=0)
        for t in range(T)
    ]

    # ---- serial recurrence: ONE (B,H)x(H,3H) MXU dot per step --------------
    h = jnp.zeros((B, H), jnp.float32)
    hs = []
    for t in range(T):                  # T = 8, fully unrolled (static)
        gi_t = gi_steps[t]              # (B, 3H)
        gh = jnp.dot(h, whh, preferred_element_type=jnp.float32)    # (B, 3H)
        r = jax.nn.sigmoid(gi_t[:, 0:H] + gh[:, 0:H])
        z = jax.nn.sigmoid(gi_t[:, H:2 * H] + gh[:, H:2 * H])
        n = jnp.tanh(gi_t[:, 2 * H:3 * H] + r * (gh[:, 2 * H:3 * H] + b_hn))
        h = (1.0 - z) * n + z * h
        hs.append(h)

    # ---- epilogue: single fused head matmul --------------------------------
    a = jnp.concatenate(hs, axis=1)                                  # (B, T*H)
    out = jnp.dot(a, head_w_ref[...],
                  preferred_element_type=jnp.float32) + head_b_ref[...]
    out_ref[...] = out


# ----------------------------------------------------------------------------
# One-time parameter re-layout (outside the per-call jit path)
# ----------------------------------------------------------------------------
def prepare_params(params):
    """Fuse/transpose GRU + head weights once at load time."""
    H = params["w_hh"].shape[1]
    w_ih, w_hh = params["w_ih"], params["w_hh"]      # (3H, I), (3H, H)
    b_ih, b_hh = params["b_ih"], params["b_hh"]      # (3H,),  (3H,)
    bias = jnp.concatenate([
        b_ih[0:H] + b_hh[0:H],            # r: input+recurrent bias fused
        b_ih[H:2 * H] + b_hh[H:2 * H],    # z: fused
        b_ih[2 * H:3 * H],                # n: input bias only
        b_hh[2 * H:3 * H],                # n: recurrent bias (inside r*(.))
    ]).reshape(1, 4 * H)
    return {
        "wih": jnp.asarray(w_ih.T),                  # (I, 3H)
        "whh": jnp.asarray(w_hh.T),                  # (H, 3H)
        "bias": bias,                                # (1, 4H)
        "head_w": params["head_w"],                  # (T*H, 3)
        "head_b": params["head_b"].reshape(1, 3),    # (1, 3)
    }


# ----------------------------------------------------------------------------
# Wrapper (mirrors the PyTorch forward)
# ----------------------------------------------------------------------------
def gru_module_forward(x, prepped):
    """x: (B, n_max_seq, d_model) float32. Returns (h1, h2, h3), each (B, 1)."""
    B = x.shape[0]
    vmem = pl.BlockSpec(memory_space=pltpu.MemorySpace.VMEM)
    out3 = pl.pallas_call(
        gru_head_kernel,
        out_shape=jax.ShapeDtypeStruct((B, 3), jnp.float32),
        in_specs=[vmem] * 6,
        out_specs=vmem,
    )(x, prepped["wih"], prepped["whh"], prepped["bias"],
      prepped["head_w"], prepped["head_b"])
    return out3[:, 0:1], out3[:, 1:2], out3[:, 2:3]


# ----------------------------------------------------------------------------
# Pure-JAX reference (for correctness check)
# ----------------------------------------------------------------------------
def gru_ref(x, params):
    B = x.shape[0]
    x_bti = jnp.transpose(x, (0, 2, 1))
    H = params["w_hh"].shape[1]
    wih_t, whh_t = params["w_ih"].T, params["w_hh"].T
    bih, bhh = params["b_ih"], params["b_hh"]

    def step(h, x_t):
        gi = x_t @ wih_t + bih
        gh = h @ whh_t + bhh
        r = jax.nn.sigmoid(gi[:, :H] + gh[:, :H])
        z = jax.nn.sigmoid(gi[:, H:2 * H] + gh[:, H:2 * H])
        n = jnp.tanh(gi[:, 2 * H:] + r * gh[:, 2 * H:])
        h_new = (1.0 - z) * n + z * h
        return h_new, h_new

    h0 = jnp.zeros((B, H), jnp.float32)
    _, hs = lax.scan(step, h0, jnp.transpose(x_bti, (1, 0, 2)))
    a = jnp.transpose(hs, (1, 0, 2)).reshape(B, -1)
    out3 = a @ params["head_w"] + params["head_b"]
    return out3[:, 0:1], out3[:, 1:2], out3[:, 2:3]


# ----------------------------------------------------------------------------
# Main
# ----------------------------------------------------------------------------
if __name__ == "__main__":
    # opt: n_max_seq=16 (GRU input size), d_inner=32 (hidden), d_model=8 (seq
    #      length after permute), n_layers=1, bidirect=False, dropout=0.0
    B, n_max_seq, d_model, d_inner = 2, 16, 8, 32
    I, T, H = n_max_seq, d_model, d_inner
    F = d_inner * d_model  # head input features = 256

    key = jax.random.PRNGKey(0)
    k = jax.random.split(key, 8)

    s_gru = 1.0 / jnp.sqrt(H)
    s_head = 1.0 / jnp.sqrt(F)
    params = {
        "w_ih": jax.random.uniform(k[0], (3 * H, I), jnp.float32, -s_gru, s_gru),
        "w_hh": jax.random.uniform(k[1], (3 * H, H), jnp.float32, -s_gru, s_gru),
        "b_ih": jax.random.uniform(k[2], (3 * H,), jnp.float32, -s_gru, s_gru),
        "b_hh": jax.random.uniform(k[3], (3 * H,), jnp.float32, -s_gru, s_gru),
        # three Linear(F, 1) heads fused as (F, 3) weight + (3,) bias
        "head_w": jax.random.uniform(k[4], (F, 3), jnp.float32, -s_head, s_head),
        "head_b": jax.random.uniform(k[5], (3,), jnp.float32, -s_head, s_head),
    }

    x = jax.random.normal(k[6], (B, n_max_seq, d_model), jnp.float32)

    # One-time weight re-layout, hoisted out of the jitted per-call path.
    prepped = prepare_params(params)

    fwd = jax.jit(gru_module_forward)
    h1, h2, h3 = jax.block_until_ready(fwd(x, prepped))
    r1, r2, r3 = gru_ref(x, params)

    assert h1.shape == (B, 1) and h2.shape == (B, 1) and h3.shape == (B, 1)
    assert jnp.allclose(h1, r1, atol=1e-4, rtol=1e-4)
    assert jnp.allclose(h2, r2, atol=1e-4, rtol=1e-4)
    assert jnp.allclose(h3, r3, atol=1e-4, rtol=1e-4)

    print("KERNEL_OK")
</pallas_src>

<mosaic_0001>
module attributes {stable_mosaic.version = 11 : i64} {
  func.func @gru_head_kernel(%arg0: memref<2x16x8xf32, #tpu.memory_space<vmem>>, %arg1: memref<16x96xf32, #tpu.memory_space<vmem>>, %arg2: memref<32x96xf32, #tpu.memory_space<vmem>>, %arg3: memref<1x128xf32, #tpu.memory_space<vmem>>, %arg4: memref<256x3xf32, #tpu.memory_space<vmem>>, %arg5: memref<1x3xf32, #tpu.memory_space<vmem>>, %arg6: memref<2x3xf32, #tpu.memory_space<vmem>>) attributes {dimension_semantics = [], scalar_prefetch = 0 : i64, scratch_operands = 0 : i64, tpu.core_type = #tpu.core_type<tc>} {
    %c0 = arith.constant 0 : index
    %c0_0 = arith.constant 0 : index
    %c0_1 = arith.constant 0 : index
    %0 = vector.load %arg0[%c0, %c0_0, %c0_1] : memref<2x16x8xf32, #tpu.memory_space<vmem>>, vector<2x16x8xf32>
    %c0_2 = arith.constant 0 : index
    %c0_3 = arith.constant 0 : index
    %1 = vector.load %arg1[%c0_2, %c0_3] : memref<16x96xf32, #tpu.memory_space<vmem>>, vector<16x96xf32>
    %c0_4 = arith.constant 0 : index
    %c0_5 = arith.constant 0 : index
    %2 = vector.load %arg2[%c0_4, %c0_5] : memref<32x96xf32, #tpu.memory_space<vmem>>, vector<32x96xf32>
    %c0_6 = arith.constant 0 : index
    %c0_7 = arith.constant 0 : index
    %3 = vector.load %arg3[%c0_6, %c0_7] : memref<1x128xf32, #tpu.memory_space<vmem>>, vector<1x96xf32>
    %c0_8 = arith.constant 0 : index
    %c96 = arith.constant 96 : index
    %4 = vector.load %arg3[%c0_8, %c96] : memref<1x128xf32, #tpu.memory_space<vmem>>, vector<1x32xf32>
    %5 = vector.extract_strided_slice %0 {offsets = [0, 0, 0], sizes = [1, 16, 8], strides = [1, 1, 1]} : vector<2x16x8xf32> to vector<1x16x8xf32>
    %6 = vector.shape_cast %5 : vector<1x16x8xf32> to vector<16x8xf32>
    %7 = vector.extract_strided_slice %0 {offsets = [1, 0, 0], sizes = [1, 16, 8], strides = [1, 1, 1]} : vector<2x16x8xf32> to vector<1x16x8xf32>
    %8 = vector.shape_cast %7 : vector<1x16x8xf32> to vector<16x8xf32>
    %9 = tpu.concatenate %6, %8 in 1 : vector<16x8xf32>, vector<16x8xf32> -> vector<16x16xf32>
    %10 = tpu.transpose %9, [1, 0] : vector<16x16xf32> -> vector<16x16xf32>
    %cst = arith.constant dense<0.000000e+00> : vector<16x96xf32>
    %11 = tpu.matmul %10, %1, %cst {dimension_numbers = #tpu.dot_dimension_numbers<[1], [0], [0], [1], [0, 0, 1, 1], [], []>} : vector<16x16xf32>, vector<16x96xf32>, vector<16x96xf32> -> vector<16x96xf32>
    %12 = vector.broadcast %3 : vector<1x96xf32> to vector<16x96xf32>
    %13 = arith.addf %11, %12 : vector<16x96xf32>
    %14 = vector.extract_strided_slice %13 {offsets = [0, 0], sizes = [1, 96], strides = [1, 1]} : vector<16x96xf32> to vector<1x96xf32>
    %15 = vector.extract_strided_slice %13 {offsets = [8, 0], sizes = [1, 96], strides = [1, 1]} : vector<16x96xf32> to vector<1x96xf32>
    %16 = tpu.concatenate %14, %15 in 0 : vector<1x96xf32>, vector<1x96xf32> -> vector<2x96xf32>
    %17 = vector.extract_strided_slice %13 {offsets = [1, 0], sizes = [1, 96], strides = [1, 1]} : vector<16x96xf32> to vector<1x96xf32>
    %18 = vector.extract_strided_slice %13 {offsets = [9, 0], sizes = [1, 96], strides = [1, 1]} : vector<16x96xf32> to vector<1x96xf32>
    %19 = tpu.concatenate %17, %18 in 0 : vector<1x96xf32>, vector<1x96xf32> -> vector<2x96xf32>
    %20 = vector.extract_strided_slice %13 {offsets = [2, 0], sizes = [1, 96], strides = [1, 1]} : vector<16x96xf32> to vector<1x96xf32>
    %21 = vector.extract_strided_slice %13 {offsets = [10, 0], sizes = [1, 96], strides = [1, 1]} : vector<16x96xf32> to vector<1x96xf32>
    %22 = tpu.concatenate %20, %21 in 0 : vector<1x96xf32>, vector<1x96xf32> -> vector<2x96xf32>
    %23 = vector.extract_strided_slice %13 {offsets = [3, 0], sizes = [1, 96], strides = [1, 1]} : vector<16x96xf32> to vector<1x96xf32>
    %24 = vector.extract_strided_slice %13 {offsets = [11, 0], sizes = [1, 96], strides = [1, 1]} : vector<16x96xf32> to vector<1x96xf32>
    %25 = tpu.concatenate %23, %24 in 0 : vector<1x96xf32>, vector<1x96xf32> -> vector<2x96xf32>
    %26 = vector.extract_strided_slice %13 {offsets = [4, 0], sizes = [1, 96], strides = [1, 1]} : vector<16x96xf32> to vector<1x96xf32>
    %27 = vector.extract_strided_slice %13 {offsets = [12, 0], sizes = [1, 96], strides = [1, 1]} : vector<16x96xf32> to vector<1x96xf32>
    %28 = tpu.concatenate %26, %27 in 0 : vector<1x96xf32>, vector<1x96xf32> -> vector<2x96xf32>
    %29 = vector.extract_strided_slice %13 {offsets = [5, 0], sizes = [1, 96], strides = [1, 1]} : vector<16x96xf32> to vector<1x96xf32>
    %30 = vector.extract_strided_slice %13 {offsets = [13, 0], sizes = [1, 96], strides = [1, 1]} : vector<16x96xf32> to vector<1x96xf32>
    %31 = tpu.concatenate %29, %30 in 0 : vector<1x96xf32>, vector<1x96xf32> -> vector<2x96xf32>
    %32 = vector.extract_strided_slice %13 {offsets = [6, 0], sizes = [1, 96], strides = [1, 1]} : vector<16x96xf32> to vector<1x96xf32>
    %33 = vector.extract_strided_slice %13 {offsets = [14, 0], sizes = [1, 96], strides = [1, 1]} : vector<16x96xf32> to vector<1x96xf32>
    %34 = tpu.concatenate %32, %33 in 0 : vector<1x96xf32>, vector<1x96xf32> -> vector<2x96xf32>
    %35 = vector.extract_strided_slice %13 {offsets = [7, 0], sizes = [1, 96], strides = [1, 1]} : vector<16x96xf32> to vector<1x96xf32>
    %36 = vector.extract_strided_slice %13 {offsets = [15, 0], sizes = [1, 96], strides = [1, 1]} : vector<16x96xf32> to vector<1x96xf32>
    %37 = tpu.concatenate %35, %36 in 0 : vector<1x96xf32>, vector<1x96xf32> -> vector<2x96xf32>
    %cst_9 = arith.constant 0.000000e+00 : f32
    %38 = vector.broadcast %cst_9 : f32 to vector<2x32xf32>
    %cst_10 = arith.constant dense<0.000000e+00> : vector<2x96xf32>
    %39 = tpu.matmul %38, %2, %cst_10 {dimension_numbers = #tpu.dot_dimension_numbers<[1], [0], [0], [1], [0, 0, 1, 1], [], []>} : vector<2x32xf32>, vector<32x96xf32>, vector<2x96xf32> -> vector<2x96xf32>
    %40 = vector.extract_strided_slice %16 {offsets = [0, 0], sizes = [2, 32], strides = [1, 1]} : vector<2x96xf32> to vector<2x32xf32>
    %41 = vector.extract_strided_slice %39 {offsets = [0, 0], sizes = [2, 32], strides = [1, 1]} : vector<2x96xf32> to vector<2x32xf32>
    %42 = arith.addf %40, %41 : vector<2x32xf32>
    %43 = arith.negf %42 : vector<2x32xf32>
    %44 = math.exp %43 : vector<2x32xf32>
    %cst_11 = arith.constant 1.000000e+00 : f32
    %45 = vector.broadcast %cst_11 : f32 to vector<2x32xf32>
    %46 = arith.addf %45, %44 : vector<2x32xf32>
    %47 = arith.divf %45, %46 : vector<2x32xf32>
    %48 = vector.extract_strided_slice %16 {offsets = [0, 32], sizes = [2, 32], strides = [1, 1]} : vector<2x96xf32> to vector<2x32xf32>
    %49 = vector.extract_strided_slice %39 {offsets = [0, 32], sizes = [2, 32], strides = [1, 1]} : vector<2x96xf32> to vector<2x32xf32>
    %50 = arith.addf %48, %49 : vector<2x32xf32>
    %51 = arith.negf %50 : vector<2x32xf32>
    %52 = math.exp %51 : vector<2x32xf32>
    %cst_12 = arith.constant 1.000000e+00 : f32
    %53 = vector.broadcast %cst_12 : f32 to vector<2x32xf32>
    %54 = arith.addf %53, %52 : vector<2x32xf32>
    %55 = arith.divf %53, %54 : vector<2x32xf32>
    %56 = vector.extract_strided_slice %16 {offsets = [0, 64], sizes = [2, 32], strides = [1, 1]} : vector<2x96xf32> to vector<2x32xf32>
    %57 = vector.extract_strided_slice %39 {offsets = [0, 64], sizes = [2, 32], strides = [1, 1]} : vector<2x96xf32> to vector<2x32xf32>
    %58 = vector.broadcast %4 : vector<1x32xf32> to vector<2x32xf32>
    %59 = arith.addf %57, %58 : vector<2x32xf32>
    %60 = arith.mulf %47, %59 : vector<2x32xf32>
    %61 = arith.addf %56, %60 : vector<2x32xf32>
    %62 = math.tanh %61 : vector<2x32xf32>
    %cst_13 = arith.constant 1.000000e+00 : f32
    %63 = vector.broadcast %cst_13 : f32 to vector<2x32xf32>
    %64 = arith.subf %63, %55 : vector<2x32xf32>
    %65 = arith.mulf %64, %62 : vector<2x32xf32>
    %66 = arith.mulf %55, %38 : vector<2x32xf32>
    %67 = arith.addf %65, %66 : vector<2x32xf32>
    %cst_14 = arith.constant dense<0.000000e+00> : vector<2x96xf32>
    %68 = tpu.matmul %67, %2, %cst_14 {dimension_numbers = #tpu.dot_dimension_numbers<[1], [0], [0], [1], [0, 0, 1, 1], [], []>} : vector<2x32xf32>, vector<32x96xf32>, vector<2x96xf32> -> vector<2x96xf32>
    %69 = vector.extract_strided_slice %19 {offsets = [0, 0], sizes = [2, 32], strides = [1, 1]} : vector<2x96xf32> to vector<2x32xf32>
    %70 = vector.extract_strided_slice %68 {offsets = [0, 0], sizes = [2, 32], strides = [1, 1]} : vector<2x96xf32> to vector<2x32xf32>
    %71 = arith.addf %69, %70 : vector<2x32xf32>
    %72 = arith.negf %71 : vector<2x32xf32>
    %73 = math.exp %72 : vector<2x32xf32>
    %cst_15 = arith.constant 1.000000e+00 : f32
    %74 = vector.broadcast %cst_15 : f32 to vector<2x32xf32>
    %75 = arith.addf %74, %73 : vector<2x32xf32>
    %76 = arith.divf %74, %75 : vector<2x32xf32>
    %77 = vector.extract_strided_slice %19 {offsets = [0, 32], sizes = [2, 32], strides = [1, 1]} : vector<2x96xf32> to vector<2x32xf32>
    %78 = vector.extract_strided_slice %68 {offsets = [0, 32], sizes = [2, 32], strides = [1, 1]} : vector<2x96xf32> to vector<2x32xf32>
    %79 = arith.addf %77, %78 : vector<2x32xf32>
    %80 = arith.negf %79 : vector<2x32xf32>
    %81 = math.exp %80 : vector<2x32xf32>
    %cst_16 = arith.constant 1.000000e+00 : f32
    %82 = vector.broadcast %cst_16 : f32 to vector<2x32xf32>
    %83 = arith.addf %82, %81 : vector<2x32xf32>
    %84 = arith.divf %82, %83 : vector<2x32xf32>
    %85 = vector.extract_strided_slice %19 {offsets = [0, 64], sizes = [2, 32], strides = [1, 1]} : vector<2x96xf32> to vector<2x32xf32>
    %86 = vector.extract_strided_slice %68 {offsets = [0, 64], sizes = [2, 32], strides = [1, 1]} : vector<2x96xf32> to vector<2x32xf32>
    %87 = vector.broadcast %4 : vector<1x32xf32> to vector<2x32xf32>
    %88 = arith.addf %86, %87 : vector<2x32xf32>
    %89 = arith.mulf %76, %88 : vector<2x32xf32>
    %90 = arith.addf %85, %89 : vector<2x32xf32>
    %91 = math.tanh %90 : vector<2x32xf32>
    %cst_17 = arith.constant 1.000000e+00 : f32
    %92 = vector.broadcast %cst_17 : f32 to vector<2x32xf32>
    %93 = arith.subf %92, %84 : vector<2x32xf32>
    %94 = arith.mulf %93, %91 : vector<2x32xf32>
    %95 = arith.mulf %84, %67 : vector<2x32xf32>
    %96 = arith.addf %94, %95 : vector<2x32xf32>
    %cst_18 = arith.constant dense<0.000000e+00> : vector<2x96xf32>
    %97 = tpu.matmul %96, %2, %cst_18 {dimension_numbers = #tpu.dot_dimension_numbers<[1], [0], [0], [1], [0, 0, 1, 1], [], []>} : vector<2x32xf32>, vector<32x96xf32>, vector<2x96xf32> -> vector<2x96xf32>
    %98 = vector.extract_strided_slice %22 {offsets = [0, 0], sizes = [2, 32], strides = [1, 1]} : vector<2x96xf32> to vector<2x32xf32>
    %99 = vector.extract_strided_slice %97 {offsets = [0, 0], sizes = [2, 32], strides = [1, 1]} : vector<2x96xf32> to vector<2x32xf32>
    %100 = arith.addf %98, %99 : vector<2x32xf32>
    %101 = arith.negf %100 : vector<2x32xf32>
    %102 = math.exp %101 : vector<2x32xf32>
    %cst_19 = arith.constant 1.000000e+00 : f32
    %103 = vector.broadcast %cst_19 : f32 to vector<2x32xf32>
    %104 = arith.addf %103, %102 : vector<2x32xf32>
    %105 = arith.divf %103, %104 : vector<2x32xf32>
    %106 = vector.extract_strided_slice %22 {offsets = [0, 32], sizes = [2, 32], strides = [1, 1]} : vector<2x96xf32> to vector<2x32xf32>
    %107 = vector.extract_strided_slice %97 {offsets = [0, 32], sizes = [2, 32], strides = [1, 1]} : vector<2x96xf32> to vector<2x32xf32>
    %108 = arith.addf %106, %107 : vector<2x32xf32>
    %109 = arith.negf %108 : vector<2x32xf32>
    %110 = math.exp %109 : vector<2x32xf32>
    %cst_20 = arith.constant 1.000000e+00 : f32
    %111 = vector.broadcast %cst_20 : f32 to vector<2x32xf32>
    %112 = arith.addf %111, %110 : vector<2x32xf32>
    %113 = arith.divf %111, %112 : vector<2x32xf32>
    %114 = vector.extract_strided_slice %22 {offsets = [0, 64], sizes = [2, 32], strides = [1, 1]} : vector<2x96xf32> to vector<2x32xf32>
    %115 = vector.extract_strided_slice %97 {offsets = [0, 64], sizes = [2, 32], strides = [1, 1]} : vector<2x96xf32> to vector<2x32xf32>
    %116 = vector.broadcast %4 : vector<1x32xf32> to vector<2x32xf32>
    %117 = arith.addf %115, %116 : vector<2x32xf32>
    %118 = arith.mulf %105, %117 : vector<2x32xf32>
    %119 = arith.addf %114, %118 : vector<2x32xf32>
    %120 = math.tanh %119 : vector<2x32xf32>
    %cst_21 = arith.constant 1.000000e+00 : f32
    %121 = vector.broadcast %cst_21 : f32 to vector<2x32xf32>
    %122 = arith.subf %121, %113 : vector<2x32xf32>
    %123 = arith.mulf %122, %120 : vector<2x32xf32>
    %124 = arith.mulf %113, %96 : vector<2x32xf32>
    %125 = arith.addf %123, %124 : vector<2x32xf32>
    %cst_22 = arith.constant dense<0.000000e+00> : vector<2x96xf32>
    %126 = tpu.matmul %125, %2, %cst_22 {dimension_numbers = #tpu.dot_dimension_numbers<[1], [0], [0], [1], [0, 0, 1, 1], [], []>} : vector<2x32xf32>, vector<32x96xf32>, vector<2x96xf32> -> vector<2x96xf32>
    %127 = vector.extract_strided_slice %25 {offsets = [0, 0], sizes = [2, 32], strides = [1, 1]} : vector<2x96xf32> to vector<2x32xf32>
    %128 = vector.extract_strided_slice %126 {offsets = [0, 0], sizes = [2, 32], strides = [1, 1]} : vector<2x96xf32> to vector<2x32xf32>
    %129 = arith.addf %127, %128 : vector<2x32xf32>
    %130 = arith.negf %129 : vector<2x32xf32>
    %131 = math.exp %130 : vector<2x32xf32>
    %cst_23 = arith.constant 1.000000e+00 : f32
    %132 = vector.broadcast %cst_23 : f32 to vector<2x32xf32>
    %133 = arith.addf %132, %131 : vector<2x32xf32>
    %134 = arith.divf %132, %133 : vector<2x32xf32>
    %135 = vector.extract_strided_slice %25 {offsets = [0, 32], sizes = [2, 32], strides = [1, 1]} : vector<2x96xf32> to vector<2x32xf32>
    %136 = vector.extract_strided_slice %126 {offsets = [0, 32], sizes = [2, 32], strides = [1, 1]} : vector<2x96xf32> to vector<2x32xf32>
    %137 = arith.addf %135, %136 : vector<2x32xf32>
    %138 = arith.negf %137 : vector<2x32xf32>
    %139 = math.exp %138 : vector<2x32xf32>
    %cst_24 = arith.constant 1.000000e+00 : f32
    %140 = vector.broadcast %cst_24 : f32 to vector<2x32xf32>
    %141 = arith.addf %140, %139 : vector<2x32xf32>
    %142 = arith.divf %140, %141 : vector<2x32xf32>
    %143 = vector.extract_strided_slice %25 {offsets = [0, 64], sizes = [2, 32], strides = [1, 1]} : vector<2x96xf32> to vector<2x32xf32>
    %144 = vector.extract_strided_slice %126 {offsets = [0, 64], sizes = [2, 32], strides = [1, 1]} : vector<2x96xf32> to vector<2x32xf32>
    %145 = vector.broadcast %4 : vector<1x32xf32> to vector<2x32xf32>
    %146 = arith.addf %144, %145 : vector<2x32xf32>
    %147 = arith.mulf %134, %146 : vector<2x32xf32>
    %148 = arith.addf %143, %147 : vector<2x32xf32>
    %149 = math.tanh %148 : vector<2x32xf32>
    %cst_25 = arith.constant 1.000000e+00 : f32
    %150 = vector.broadcast %cst_25 : f32 to vector<2x32xf32>
    %151 = arith.subf %150, %142 : vector<2x32xf32>
    %152 = arith.mulf %151, %149 : vector<2x32xf32>
    %153 = arith.mulf %142, %125 : vector<2x32xf32>
    %154 = arith.addf %152, %153 : vector<2x32xf32>
    %cst_26 = arith.constant dense<0.000000e+00> : vector<2x96xf32>
    %155 = tpu.matmul %154, %2, %cst_26 {dimension_numbers = #tpu.dot_dimension_numbers<[1], [0], [0], [1], [0, 0, 1, 1], [], []>} : vector<2x32xf32>, vector<32x96xf32>, vector<2x96xf32> -> vector<2x96xf32>
    %156 = vector.extract_strided_slice %28 {offsets = [0, 0], sizes = [2, 32], strides = [1, 1]} : vector<2x96xf32> to vector<2x32xf32>
    %157 = vector.extract_strided_slice %155 {offsets = [0, 0], sizes = [2, 32], strides = [1, 1]} : vector<2x96xf32> to vector<2x32xf32>
    %158 = arith.addf %156, %157 : vector<2x32xf32>
    %159 = arith.negf %158 : vector<2x32xf32>
    %160 = math.exp %159 : vector<2x32xf32>
    %cst_27 = arith.constant 1.000000e+00 : f32
    %161 = vector.broadcast %cst_27 : f32 to vector<2x32xf32>
    %162 = arith.addf %161, %160 : vector<2x32xf32>
    %163 = arith.divf %161, %162 : vector<2x32xf32>
    %164 = vector.extract_strided_slice %28 {offsets = [0, 32], sizes = [2, 32], strides = [1, 1]} : vector<2x96xf32> to vector<2x32xf32>
    %165 = vector.extract_strided_slice %155 {offsets = [0, 32], sizes = [2, 32], strides = [1, 1]} : vector<2x96xf32> to vector<2x32xf32>
    %166 = arith.addf %164, %165 : vector<2x32xf32>
    %167 = arith.negf %166 : vector<2x32xf32>
    %168 = math.exp %167 : vector<2x32xf32>
    %cst_28 = arith.constant 1.000000e+00 : f32
    %169 = vector.broadcast %cst_28 : f32 to vector<2x32xf32>
    %170 = arith.addf %169, %168 : vector<2x32xf32>
    %171 = arith.divf %169, %170 : vector<2x32xf32>
    %172 = vector.extract_strided_slice %28 {offsets = [0, 64], sizes = [2, 32], strides = [1, 1]} : vector<2x96xf32> to vector<2x32xf32>
    %173 = vector.extract_strided_slice %155 {offsets = [0, 64], sizes = [2, 32], strides = [1, 1]} : vector<2x96xf32> to vector<2x32xf32>
    %174 = vector.broadcast %4 : vector<1x32xf32> to vector<2x32xf32>
    %175 = arith.addf %173, %174 : vector<2x32xf32>
    %176 = arith.mulf %163, %175 : vector<2x32xf32>
    %177 = arith.addf %172, %176 : vector<2x32xf32>
    %178 = math.tanh %177 : vector<2x32xf32>
    %cst_29 = arith.constant 1.000000e+00 : f32
    %179 = vector.broadcast %cst_29 : f32 to vector<2x32xf32>
    %180 = arith.subf %179, %171 : vector<2x32xf32>
    %181 = arith.mulf %180, %178 : vector<2x32xf32>
    %182 = arith.mulf %171, %154 : vector<2x32xf32>
    %183 = arith.addf %181, %182 : vector<2x32xf32>
    %cst_30 = arith.constant dense<0.000000e+00> : vector<2x96xf32>
    %184 = tpu.matmul %183, %2, %cst_30 {dimension_numbers = #tpu.dot_dimension_numbers<[1], [0], [0], [1], [0, 0, 1, 1], [], []>} : vector<2x32xf32>, vector<32x96xf32>, vector<2x96xf32> -> vector<2x96xf32>
    %185 = vector.extract_strided_slice %31 {offsets = [0, 0], sizes = [2, 32], strides = [1, 1]} : vector<2x96xf32> to vector<2x32xf32>
    %186 = vector.extract_strided_slice %184 {offsets = [0, 0], sizes = [2, 32], strides = [1, 1]} : vector<2x96xf32> to vector<2x32xf32>
    %187 = arith.addf %185, %186 : vector<2x32xf32>
    %188 = arith.negf %187 : vector<2x32xf32>
    %189 = math.exp %188 : vector<2x32xf32>
    %cst_31 = arith.constant 1.000000e+00 : f32
    %190 = vector.broadcast %cst_31 : f32 to vector<2x32xf32>
    %191 = arith.addf %190, %189 : vector<2x32xf32>
    %192 = arith.divf %190, %191 : vector<2x32xf32>
    %193 = vector.extract_strided_slice %31 {offsets = [0, 32], sizes = [2, 32], strides = [1, 1]} : vector<2x96xf32> to vector<2x32xf32>
    %194 = vector.extract_strided_slice %184 {offsets = [0, 32], sizes = [2, 32], strides = [1, 1]} : vector<2x96xf32> to vector<2x32xf32>
    %195 = arith.addf %193, %194 : vector<2x32xf32>
    %196 = arith.negf %195 : vector<2x32xf32>
    %197 = math.exp %196 : vector<2x32xf32>
    %cst_32 = arith.constant 1.000000e+00 : f32
    %198 = vector.broadcast %cst_32 : f32 to vector<2x32xf32>
    %199 = arith.addf %198, %197 : vector<2x32xf32>
    %200 = arith.divf %198, %199 : vector<2x32xf32>
    %201 = vector.extract_strided_slice %31 {offsets = [0, 64], sizes = [2, 32], strides = [1, 1]} : vector<2x96xf32> to vector<2x32xf32>
    %202 = vector.extract_strided_slice %184 {offsets = [0, 64], sizes = [2, 32], strides = [1, 1]} : vector<2x96xf32> to vector<2x32xf32>
    %203 = vector.broadcast %4 : vector<1x32xf32> to vector<2x32xf32>
    %204 = arith.addf %202, %203 : vector<2x32xf32>
    %205 = arith.mulf %192, %204 : vector<2x32xf32>
    %206 = arith.addf %201, %205 : vector<2x32xf32>
    %207 = math.tanh %206 : vector<2x32xf32>
    %cst_33 = arith.constant 1.000000e+00 : f32
    %208 = vector.broadcast %cst_33 : f32 to vector<2x32xf32>
    %209 = arith.subf %208, %200 : vector<2x32xf32>
    %210 = arith.mulf %209, %207 : vector<2x32xf32>
    %211 = arith.mulf %200, %183 : vector<2x32xf32>
    %212 = arith.addf %210, %211 : vector<2x32xf32>
    %cst_34 = arith.constant dense<0.000000e+00> : vector<2x96xf32>
    %213 = tpu.matmul %212, %2, %cst_34 {dimension_numbers = #tpu.dot_dimension_numbers<[1], [0], [0], [1], [0, 0, 1, 1], [], []>} : vector<2x32xf32>, vector<32x96xf32>, vector<2x96xf32> -> vector<2x96xf32>
    %214 = vector.extract_strided_slice %34 {offsets = [0, 0], sizes = [2, 32], strides = [1, 1]} : vector<2x96xf32> to vector<2x32xf32>
    %215 = vector.extract_strided_slice %213 {offsets = [0, 0], sizes = [2, 32], strides = [1, 1]} : vector<2x96xf32> to vector<2x32xf32>
    %216 = arith.addf %214, %215 : vector<2x32xf32>
    %217 = arith.negf %216 : vector<2x32xf32>
    %218 = math.exp %217 : vector<2x32xf32>
    %cst_35 = arith.constant 1.000000e+00 : f32
    %219 = vector.broadcast %cst_35 : f32 to vector<2x32xf32>
    %220 = arith.addf %219, %218 : vector<2x32xf32>
    %221 = arith.divf %219, %220 : vector<2x32xf32>
    %222 = vector.extract_strided_slice %34 {offsets = [0, 32], sizes = [2, 32], strides = [1, 1]} : vector<2x96xf32> to vector<2x32xf32>
    %223 = vector.extract_strided_slice %213 {offsets = [0, 32], sizes = [2, 32], strides = [1, 1]} : vector<2x96xf32> to vector<2x32xf32>
    %224 = arith.addf %222, %223 : vector<2x32xf32>
    %225 = arith.negf %224 : vector<2x32xf32>
    %226 = math.exp %225 : vector<2x32xf32>
    %cst_36 = arith.constant 1.000000e+00 : f32
    %227 = vector.broadcast %cst_36 : f32 to vector<2x32xf32>
    %228 = arith.addf %227, %226 : vector<2x32xf32>
    %229 = arith.divf %227, %228 : vector<2x32xf32>
    %230 = vector.extract_strided_slice %34 {offsets = [0, 64], sizes = [2, 32], strides = [1, 1]} : vector<2x96xf32> to vector<2x32xf32>
    %231 = vector.extract_strided_slice %213 {offsets = [0, 64], sizes = [2, 32], strides = [1, 1]} : vector<2x96xf32> to vector<2x32xf32>
    %232 = vector.broadcast %4 : vector<1x32xf32> to vector<2x32xf32>
    %233 = arith.addf %231, %232 : vector<2x32xf32>
    %234 = arith.mulf %221, %233 : vector<2x32xf32>
    %235 = arith.addf %230, %234 : vector<2x32xf32>
    %236 = math.tanh %235 : vector<2x32xf32>
    %cst_37 = arith.constant 1.000000e+00 : f32
    %237 = vector.broadcast %cst_37 : f32 to vector<2x32xf32>
    %238 = arith.subf %237, %229 : vector<2x32xf32>
    %239 = arith.mulf %238, %236 : vector<2x32xf32>
    %240 = arith.mulf %229, %212 : vector<2x32xf32>
    %241 = arith.addf %239, %240 : vector<2x32xf32>
    %cst_38 = arith.constant dense<0.000000e+00> : vector<2x96xf32>
    %242 = tpu.matmul %241, %2, %cst_38 {dimension_numbers = #tpu.dot_dimension_numbers<[1], [0], [0], [1], [0, 0, 1, 1], [], []>} : vector<2x32xf32>, vector<32x96xf32>, vector<2x96xf32> -> vector<2x96xf32>
    %243 = vector.extract_strided_slice %37 {offsets = [0, 0], sizes = [2, 32], strides = [1, 1]} : vector<2x96xf32> to vector<2x32xf32>
    %244 = vector.extract_strided_slice %242 {offsets = [0, 0], sizes = [2, 32], strides = [1, 1]} : vector<2x96xf32> to vector<2x32xf32>
    %245 = arith.addf %243, %244 : vector<2x32xf32>
    %246 = arith.negf %245 : vector<2x32xf32>
    %247 = math.exp %246 : vector<2x32xf32>
    %cst_39 = arith.constant 1.000000e+00 : f32
    %248 = vector.broadcast %cst_39 : f32 to vector<2x32xf32>
    %249 = arith.addf %248, %247 : vector<2x32xf32>
    %250 = arith.divf %248, %249 : vector<2x32xf32>
    %251 = vector.extract_strided_slice %37 {offsets = [0, 32], sizes = [2, 32], strides = [1, 1]} : vector<2x96xf32> to vector<2x32xf32>
    %252 = vector.extract_strided_slice %242 {offsets = [0, 32], sizes = [2, 32], strides = [1, 1]} : vector<2x96xf32> to vector<2x32xf32>
    %253 = arith.addf %251, %252 : vector<2x32xf32>
    %254 = arith.negf %253 : vector<2x32xf32>
    %255 = math.exp %254 : vector<2x32xf32>
    %cst_40 = arith.constant 1.000000e+00 : f32
    %256 = vector.broadcast %cst_40 : f32 to vector<2x32xf32>
    %257 = arith.addf %256, %255 : vector<2x32xf32>
    %258 = arith.divf %256, %257 : vector<2x32xf32>
    %259 = vector.extract_strided_slice %37 {offsets = [0, 64], sizes = [2, 32], strides = [1, 1]} : vector<2x96xf32> to vector<2x32xf32>
    %260 = vector.extract_strided_slice %242 {offsets = [0, 64], sizes = [2, 32], strides = [1, 1]} : vector<2x96xf32> to vector<2x32xf32>
    %261 = vector.broadcast %4 : vector<1x32xf32> to vector<2x32xf32>
    %262 = arith.addf %260, %261 : vector<2x32xf32>
    %263 = arith.mulf %250, %262 : vector<2x32xf32>
    %264 = arith.addf %259, %263 : vector<2x32xf32>
    %265 = math.tanh %264 : vector<2x32xf32>
    %cst_41 = arith.constant 1.000000e+00 : f32
    %266 = vector.broadcast %cst_41 : f32 to vector<2x32xf32>
    %267 = arith.subf %266, %258 : vector<2x32xf32>
    %268 = arith.mulf %267, %265 : vector<2x32xf32>
    %269 = arith.mulf %258, %241 : vector<2x32xf32>
    %270 = arith.addf %268, %269 : vector<2x32xf32>
    %271 = tpu.concatenate %67, %96, %125, %154, %183, %212, %241, %270 in 1 : vector<2x32xf32>, vector<2x32xf32>, vector<2x32xf32>, vector<2x32xf32>, vector<2x32xf32>, vector<2x32xf32>, vector<2x32xf32>, vector<2x32xf32> -> vector<2x256xf32>
    %c0_42 = arith.constant 0 : index
    %c0_43 = arith.constant 0 : index
    %272 = vector.load %arg4[%c0_42, %c0_43] : memref<256x3xf32, #tpu.memory_space<vmem>>, vector<256x3xf32>
    %cst_44 = arith.constant dense<0.000000e+00> : vector<2x3xf32>
    %273 = tpu.matmul %271, %272, %cst_44 {dimension_numbers = #tpu.dot_dimension_numbers<[1], [0], [0], [1], [0, 0, 1, 1], [], []>} : vector<2x256xf32>, vector<256x3xf32>, vector<2x3xf32> -> vector<2x3xf32>
    %c0_45 = arith.constant 0 : index
    %c0_46 = arith.constant 0 : index
    %274 = vector.load %arg5[%c0_45, %c0_46] : memref<1x3xf32, #tpu.memory_space<vmem>>, vector<1x3xf32>
    %275 = vector.broadcast %274 : vector<1x3xf32> to vector<2x3xf32>
    %276 = arith.addf %273, %275 : vector<2x3xf32>
    %c0_47 = arith.constant 0 : index
    %c0_48 = arith.constant 0 : index
    %277 = vector.load %arg6[%c0_47, %c0_48] : memref<2x3xf32, #tpu.memory_space<vmem>>, vector<2x3xf32>
    tpu.vector_store %arg6[%c0_47, %c0_48], %276 {strides = array<i32>} : memref<2x3xf32, #tpu.memory_space<vmem>>, vector<2x3xf32>,
    return
  }
}

</mosaic_0001>

<llo_original>
// kernel: gru_module_forward.1
$region0: #{gru_module_forward.1}
  #allocation0 [shape = 'u32[]', space=smem, size = 0x4, offset = 0x4, fixed_abs, tag = 'smem constant byte address 0x4 - core index']
  #allocation1 [shape = 'u32[144,128]{1,0:T(1,128)}', space=vmem, size = 0x12000, scoped, tag = 'internal scratch']
  %s0 = inlined_call_operand.vmem [shape: f32[2,16,8], index: 0, kind: input, shape index: {}]
  %s1 = inlined_call_operand.vmem [shape: f32[16,96], index: 1, kind: input, shape index: {}]
  %s2 = inlined_call_operand.vmem [shape: f32[32,96], index: 2, kind: input, shape index: {}]
  %s3 = inlined_call_operand.vmem [shape: f32[1,128], index: 3, kind: input, shape index: {}]
  %s4 = inlined_call_operand.vmem [shape: f32[256,3], index: 4, kind: input, shape index: {}]
  %s5 = inlined_call_operand.vmem [shape: f32[1,3], index: 5, kind: input, shape index: {}]
  %s6 = inlined_call_operand.vmem [shape: f32[2,3], index: 6, kind: output, shape index: {}]
  %s7 = sld [smem:[#allocation0]]
  $region34: #{gru_module_forward.1} parent=0
    _
  %s9 = ssub.s32 1, %s7
  %s10 = scalar_select 0, %s9, %s7
  // Predicated region
  $region2: #{gru_module_forward.1} parent=0 // pred_check
    _
  $region3: #{gru_module_forward.1} parent=0 // pred_check_branch
    %12 = sbr.rel (0) target = $region5
  $region4: #{gru_module_forward.1} parent=0 // pred_region
    _
  $region5: #{gru_module_forward.1} parent=0 // pred_fallthru
    _
  // Predicated region
  $region6: #{gru_module_forward.1} parent=0 // pred_check
    _
  $region7: #{gru_module_forward.1} parent=0 // pred_check_branch
    %14 = sbr.rel (0) target = $region9
  $region8: #{gru_module_forward.1} parent=0 // pred_region
    _
  $region9: #{gru_module_forward.1} parent=0 // pred_fallthru
    _
  // Predicated region
  $region10: #{gru_module_forward.1} parent=0 // pred_check
    _
  $region11: #{gru_module_forward.1} parent=0 // pred_check_branch
    %16 = sbr.rel (0) target = $region13
  $region12: #{gru_module_forward.1} parent=0 // pred_region
    _
  $region13: #{gru_module_forward.1} parent=0 // pred_fallthru
    _
  // Predicated region
  $region14: #{gru_module_forward.1} parent=0 // pred_check
    _
  $region15: #{gru_module_forward.1} parent=0 // pred_check_branch
    %18 = sbr.rel (0) target = $region17
  $region16: #{gru_module_forward.1} parent=0 // pred_region
    _
  $region17: #{gru_module_forward.1} parent=0 // pred_fallthru
    _
  // Predicated region
  $region18: #{gru_module_forward.1} parent=0 // pred_check
    _
  $region19: #{gru_module_forward.1} parent=0 // pred_check_branch
    %20 = sbr.rel (0) target = $region21
  $region20: #{gru_module_forward.1} parent=0 // pred_region
    _
  $region21: #{gru_module_forward.1} parent=0 // pred_fallthru
    _
  // Predicated region
  $region22: #{gru_module_forward.1} parent=0 // pred_check
    _
  $region23: #{gru_module_forward.1} parent=0 // pred_check_branch
    %22 = sbr.rel (0) target = $region25
  $region24: #{gru_module_forward.1} parent=0 // pred_region
    _
  $region25: #{gru_module_forward.1} parent=0 // pred_fallthru
    _
  %v23 = vld [vmem:[%s0] sm:$0xff]
  %v24 = vld [vmem:[%s0 + $0x8] sm:$0xff]
  %v25 = vld [vmem:[%s0 + $0x10] sm:$0xff]
  %v26 = vld [vmem:[%s0 + $0x18] sm:$0xff]
  %v27 = vld [vmem:[%s1] sm:$0xff]
  %v28 = vld [vmem:[%s1 + $0x8] sm:$0xff]
  %v29 = vld [vmem:[%s2] sm:$0xff]
  %v30 = vld [vmem:[%s2 + $0x8] sm:$0xff]
  %v31 = vld [vmem:[%s2 + $0x10] sm:$0xff]
  %v32 = vld [vmem:[%s2 + $0x18] sm:$0xff]
  %v33 = vld [vmem:[%s3] sm:$0x1]
  %36 = vrot.lane.b32.xlu0 %v25, 8
  %v37 = vpop.permute.xlu0 %36
  %38 = vrot.lane.b32.xlu0 %v26, 8
  %v39 = vpop.permute.xlu0 %38
  %vm42 = vcmask 64512
  %v43 = vsel %vm42, %v23, %v37
  %v44 = vsel %vm42, %v24, %v39
  %45 = vxpose.xlu0.b32.start [1/16] %v43, 128
  %46 = vxpose.xlu0.b32.cont [2/16] %v44, 128
  %47 = vxpose.xlu0.b32.cont [3/16] 0.0, 128
  %48 = vxpose.xlu0.b32.cont [4/16] 0.0, 128
  %49 = vxpose.xlu0.b32.cont [5/16] 0.0, 128
  %50 = vxpose.xlu0.b32.cont [6/16] 0.0, 128
  %51 = vxpose.xlu0.b32.cont [7/16] 0.0, 128
  %52 = vxpose.xlu0.b32.cont [8/16] 0.0, 128
  %53 = vxpose.xlu0.b32.cont [9/16] 0.0, 128
  %54 = vxpose.xlu0.b32.cont [10/16] 0.0, 128
  %55 = vxpose.xlu0.b32.cont [11/16] 0.0, 128
  %56 = vxpose.xlu0.b32.cont [12/16] 0.0, 128
  %57 = vxpose.xlu0.b32.cont [13/16] 0.0, 128
  %58 = vxpose.xlu0.b32.cont [14/16] 0.0, 128
  %59 = vxpose.xlu0.b32.cont [15/16] 0.0, 128
  %60 = vxpose.xlu0.b32.end [16/16] 0.0, 128
  %v61 = vpop.trf.xlu0
  %v62 = vpop.trf.xlu0
  %v63 = vpop.trf.xlu0
  %v64 = vpop.trf.xlu0
  %v65 = vpop.trf.xlu0
  %v66 = vpop.trf.xlu0
  %v67 = vpop.trf.xlu0
  %v68 = vpop.trf.xlu0
  %v69 = vpop.trf.xlu0
  %v70 = vpop.trf.xlu0
  %v71 = vpop.trf.xlu0
  %v72 = vpop.trf.xlu0
  %v73 = vpop.trf.xlu0
  %v74 = vpop.trf.xlu0
  %v75 = vpop.trf.xlu0
  %v76 = vpop.trf.xlu0
  %v78 = vlaneseq
  %v79 = vshrl.u32 %v78, 7
  %v80 = vsub.s32 0, %v79
  %v81 = vrot.slane %v33, %v80
  %vm83 = vcmask 130048
  %v85 = vsel %vm83, %v61, 0
  %v88 = vsel %vm83, %v62, 0
  %90 = vmatprep.subr.mxu0 0.0
  %91 = vmatpush1.msra.mxu0 %v27
  %92 = vmatprep.subr.mxu0 0.0
  %93 = vmatpush1.msra.mxu0 %v28
  %94 = vmatprep.subr.mxu0 0.0
  %95 = vmatpush1.msra.mxu0 0.0
  %96 = vmatprep.subr.mxu0 0.0
  %97 = vmatpush1.msra.mxu0 0.0
  %98 = vmatprep.subr.mxu0 0.0
  %99 = vmatpush1.msra.mxu0 0.0
  %100 = vmatprep.subr.mxu0 0.0
  %101 = vmatpush1.msra.mxu0 0.0
  %102 = vmatprep.subr.mxu0 0.0
  %103 = vmatpush1.msra.mxu0 0.0
  %104 = vmatprep.subr.mxu0 0.0
  %105 = vmatpush1.msra.mxu0 0.0
  %106 = vmatprep.subr.mxu0 0.0
  %107 = vmatpush1.msra.mxu0 0.0
  %108 = vmatprep.subr.mxu0 0.0
  %109 = vmatpush1.msra.mxu0 0.0
  %110 = vmatprep.subr.mxu0 0.0
  %111 = vmatpush1.msra.mxu0 0.0
  %112 = vmatprep.subr.mxu0 0.0
  %113 = vmatpush1.msra.mxu0 0.0
  %114 = vmatprep.subr.mxu0 0.0
  %115 = vmatpush1.msra.mxu0 0.0
  %116 = vmatprep.subr.mxu0 0.0
  %117 = vmatpush1.msra.mxu0 0.0
  %118 = vmatprep.subr.mxu0 0.0
  %119 = vmatpush1.msra.mxu0 0.0
  %120 = vmatprep.subr.mxu0 0.0
  %121 = vmatpush1.msra.mxu0 0.0
  %122 = vmatprep.subr.mxu0 0.0
  %123 = vmatpush1.msra.mxu0 0.0
  %124 = vmatprep.subr.mxu0 0.0
  %125 = vmatpush1.msra.mxu0 0.0
  %126 = vmatprep.subr.mxu0 0.0
  %127 = vmatpush1.msra.mxu0 0.0
  %128 = vmatprep.subr.mxu0 0.0
  %129 = vmatpush1.msra.mxu0 0.0
  %130 = vmatprep.subr.mxu0 0.0
  %131 = vmatpush1.msra.mxu0 0.0
  %132 = vmatprep.subr.mxu0 0.0
  %133 = vmatpush1.msra.mxu0 0.0
  %134 = vmatprep.subr.mxu0 0.0
  %135 = vmatpush1.msra.mxu0 0.0
  %136 = vmatprep.subr.mxu0 0.0
  %137 = vmatpush1.msra.mxu0 0.0
  %138 = vmatprep.subr.mxu0 0.0
  %139 = vmatpush1.msra.mxu0 0.0
  %140 = vmatprep.subr.mxu0 0.0
  %141 = vmatpush1.msra.mxu0 0.0
  %142 = vmatprep.subr.mxu0 0.0
  %143 = vmatpush1.msra.mxu0 0.0
  %144 = vmatprep.subr.mxu0 0.0
  %145 = vmatpush1.msra.mxu0 0.0
  %146 = vmatprep.subr.mxu0 0.0
  %147 = vmatpush1.msra.mxu0 0.0
  %148 = vmatprep.subr.mxu0 0.0
  %149 = vmatpush1.msra.mxu0 0.0
  %150 = vmatprep.subr.mxu0 0.0
  %151 = vmatpush1.msra.mxu0 0.0
  %152 = vmatprep.subr.mxu0 0.0
  %153 = vmatpush1.msra.mxu0 0.0
  %154 = vmatprep.mubr.f32.mxu0 0.0
  %155 = vmatmul.mubr.f32.gmra.mrb[0].mxu0 %v85
  %v156 = vpop.f32.mrb[0].mxu0
  %v157 = vadd.f32 %v81, %v156
  %v158 = vpop.f32.mrb[0].mxu0
  %159 = vmatprep.mubr.f32.mxu0 0.0
  %160 = vmatmul.mubr.f32.gmra.mrb[0].mxu0 %v88
  %v161 = vpop.f32.mrb[0].mxu0
  %v162 = vadd.f32 %v81, %v161
  %v163 = vpop.f32.mrb[0].mxu0
  %164 = vdwg.mxu0
  %v166 = vrot.slane %v162, 7
  %vm168 = vcmask 1040384
  %v169 = vsel %vm168, %v157, %v166
  %v171 = vrot.slane %v157, 1
  %v173 = vsel %vm168, %v171, %v162
  %v174 = vrot.slane %v157, 2
  %v176 = vrot.slane %v162, 1
  %v178 = vsel %vm168, %v174, %v176
  %v179 = vrot.slane %v157, 3
  %v181 = vrot.slane %v162, 2
  %v183 = vsel %vm168, %v179, %v181
  %v184 = vrot.slane %v157, 4
  %v186 = vrot.slane %v162, 3
  %v188 = vsel %vm168, %v184, %v186
  %v189 = vrot.slane %v157, 5
  %v191 = vrot.slane %v162, 4
  %v193 = vsel %vm168, %v189, %v191
  %v194 = vrot.slane %v157, 6
  %v196 = vrot.slane %v162, 5
  %v198 = vsel %vm168, %v194, %v196
  %v199 = vrot.slane %v157, 7
  %v201 = vrot.slane %v162, 6
  %v203 = vsel %vm168, %v199, %v201
  %vm204 = vcmask 261120
  %v206 = vsel %vm204, 0.0, 0
  %208 = vmatprep.subr.mxu0 0.0
  %209 = vmatpush1.msra.mxu0 %v29
  %210 = vmatprep.subr.mxu0 0.0
  %211 = vmatpush1.msra.mxu0 %v30
  %212 = vmatprep.subr.mxu0 0.0
  %213 = vmatpush1.msra.mxu0 %v31
  %214 = vmatprep.subr.mxu0 0.0
  %215 = vmatpush1.msra.mxu0 %v32
  %216 = vmatprep.subr.mxu0 0.0
  %217 = vmatpush1.msra.mxu0 0.0
  %218 = vmatprep.subr.mxu0 0.0
  %219 = vmatpush1.msra.mxu0 0.0
  %220 = vmatprep.subr.mxu0 0.0
  %221 = vmatpush1.msra.mxu0 0.0
  %222 = vmatprep.subr.mxu0 0.0
  %223 = vmatpush1.msra.mxu0 0.0
  %224 = vmatprep.subr.mxu0 0.0
  %225 = vmatpush1.msra.mxu0 0.0
  %226 = vmatprep.subr.mxu0 0.0
  %227 = vmatpush1.msra.mxu0 0.0
  %228 = vmatprep.subr.mxu0 0.0
  %229 = vmatpush1.msra.mxu0 0.0
  %230 = vmatprep.subr.mxu0 0.0
  %231 = vmatpush1.msra.mxu0 0.0
  %232 = vmatprep.subr.mxu0 0.0
  %233 = vmatpush1.msra.mxu0 0.0
  %234 = vmatprep.subr.mxu0 0.0
  %235 = vmatpush1.msra.mxu0 0.0
  %236 = vmatprep.subr.mxu0 0.0
  %237 = vmatpush1.msra.mxu0 0.0
  %238 = vmatprep.subr.mxu0 0.0
  %239 = vmatpush1.msra.mxu0 0.0
  %240 = vmatprep.subr.mxu0 0.0
  %241 = vmatpush1.msra.mxu0 0.0
  %242 = vmatprep.subr.mxu0 0.0
  %243 = vmatpush1.msra.mxu0 0.0
  %244 = vmatprep.subr.mxu0 0.0
  %245 = vmatpush1.msra.mxu0 0.0
  %246 = vmatprep.subr.mxu0 0.0
  %247 = vmatpush1.msra.mxu0 0.0
  %248 = vmatprep.subr.mxu0 0.0
  %249 = vmatpush1.msra.mxu0 0.0
  %250 = vmatprep.subr.mxu0 0.0
  %251 = vmatpush1.msra.mxu0 0.0
  %252 = vmatprep.subr.mxu0 0.0
  %253 = vmatpush1.msra.mxu0 0.0
  %254 = vmatprep.subr.mxu0 0.0
  %255 = vmatpush1.msra.mxu0 0.0
  %256 = vmatprep.subr.mxu0 0.0
  %257 = vmatpush1.msra.mxu0 0.0
  %258 = vmatprep.subr.mxu0 0.0
  %259 = vmatpush1.msra.mxu0 0.0
  %260 = vmatprep.subr.mxu0 0.0
  %261 = vmatpush1.msra.mxu0 0.0
  %262 = vmatprep.subr.mxu0 0.0
  %263 = vmatpush1.msra.mxu0 0.0
  %264 = vmatprep.subr.mxu0 0.0
  %265 = vmatpush1.msra.mxu0 0.0
  %266 = vmatprep.subr.mxu0 0.0
  %267 = vmatpush1.msra.mxu0 0.0
  %268 = vmatprep.subr.mxu0 0.0
  %269 = vmatpush1.msra.mxu0 0.0
  %270 = vmatprep.subr.mxu0 0.0
  %271 = vmatpush1.msra.mxu0 0.0
  %272 = vmatprep.mubr.f32.mxu0 0.0
  %273 = vmatmul.mubr.f32.gmra.mrb[0].mxu0 %v206
  %v274 = vpop.f32.mrb[0].mxu0
  %v275 = vadd.f32 0.0, %v274
  %v276 = vpop.f32.mrb[0].mxu0
  %277 = vdwg.mxu0
  %v278 = vadd.f32 %v169, %v275
  %v279 = vxor.u32 %v278, 2147483648
  %v280 = vmul.f32 %v279, 1.442695
  %v281 = vpow.pop %v280
  %v282 = vadd.f32 %v281, 1.0
  %v283 = vrcp.pop %v282
  %v284 = vmul.f32 1.0, %v283
  %285 = vrot.lane.b32.xlu0 %v81, 96
  %v286 = vpop.permute.xlu0 %285
  %v288 = vadd.f32 %v275, %v286
  %290 = vrot.lane.b32.xlu0 %v288, 64
  %v291 = vpop.permute.xlu0 %290
  %v293 = vmul.f32 %v284, %v291
  %295 = vrot.lane.b32.xlu0 %v293, 64
  %v296 = vpop.permute.xlu0 %295
  %v298 = vadd.f32 %v169, %v296
  %v299 = vtanh.pop %v298
  %v300 = vsub.f32 1.0, %v284
  %302 = vrot.lane.b32.xlu0 %v299, 96
  %v303 = vpop.permute.xlu0 %302
  %v305 = vmul.f32 %v300, %v303
  %v306 = vmul.f32 %v284, 0.0
  %v307 = vadd.f32 %v305, %v306
  %309 = vrot.lane.b32.xlu0 %v307, 96
  %v310 = vpop.permute.xlu0 %309
  %v311 = vsel %vm204, %v310, 0
  %313 = vmatprep.subr.mxu0 0.0
  %314 = vmatpush1.msra.mxu0 %v29
  %315 = vmatprep.subr.mxu0 0.0
  %316 = vmatpush1.msra.mxu0 %v30
  %317 = vmatprep.subr.mxu0 0.0
  %318 = vmatpush1.msra.mxu0 %v31
  %319 = vmatprep.subr.mxu0 0.0
  %320 = vmatpush1.msra.mxu0 %v32
  %321 = vmatprep.subr.mxu0 0.0
  %322 = vmatpush1.msra.mxu0 0.0
  %323 = vmatprep.subr.mxu0 0.0
  %324 = vmatpush1.msra.mxu0 0.0
  %325 = vmatprep.subr.mxu0 0.0
  %326 = vmatpush1.msra.mxu0 0.0
  %327 = vmatprep.subr.mxu0 0.0
  %328 = vmatpush1.msra.mxu0 0.0
  %329 = vmatprep.subr.mxu0 0.0
  %330 = vmatpush1.msra.mxu0 0.0
  %331 = vmatprep.subr.mxu0 0.0
  %332 = vmatpush1.msra.mxu0 0.0
  %333 = vmatprep.subr.mxu0 0.0
  %334 = vmatpush1.msra.mxu0 0.0
  %335 = vmatprep.subr.mxu0 0.0
  %336 = vmatpush1.msra.mxu0 0.0
  %337 = vmatprep.subr.mxu0 0.0
  %338 = vmatpush1.msra.mxu0 0.0
  %339 = vmatprep.subr.mxu0 0.0
  %340 = vmatpush1.msra.mxu0 0.0
  %341 = vmatprep.subr.mxu0 0.0
  %342 = vmatpush1.msra.mxu0 0.0
  %343 = vmatprep.subr.mxu0 0.0
  %344 = vmatpush1.msra.mxu0 0.0
  %345 = vmatprep.subr.mxu0 0.0
  %346 = vmatpush1.msra.mxu0 0.0
  %347 = vmatprep.subr.mxu0 0.0
  %348 = vmatpush1.msra.mxu0 0.0
  %349 = vmatprep.subr.mxu0 0.0
  %350 = vmatpush1.msra.mxu0 0.0
  %351 = vmatprep.subr.mxu0 0.0
  %352 = vmatpush1.msra.mxu0 0.0
  %353 = vmatprep.subr.mxu0 0.0
  %354 = vmatpush1.msra.mxu0 0.0
  %355 = vmatprep.subr.mxu0 0.0
  %356 = vmatpush1.msra.mxu0 0.0
  %357 = vmatprep.subr.mxu0 0.0
  %358 = vmatpush1.msra.mxu0 0.0
  %359 = vmatprep.subr.mxu0 0.0
  %360 = vmatpush1.msra.mxu0 0.0
  %361 = vmatprep.subr.mxu0 0.0
  %362 = vmatpush1.msra.mxu0 0.0
  %363 = vmatprep.subr.mxu0 0.0
  %364 = vmatpush1.msra.mxu0 0.0
  %365 = vmatprep.subr.mxu0 0.0
  %366 = vmatpush1.msra.mxu0 0.0
  %367 = vmatprep.subr.mxu0 0.0
  %368 = vmatpush1.msra.mxu0 0.0
  %369 = vmatprep.subr.mxu0 0.0
  %370 = vmatpush1.msra.mxu0 0.0
  %371 = vmatprep.subr.mxu0 0.0
  %372 = vmatpush1.msra.mxu0 0.0
  %373 = vmatprep.subr.mxu0 0.0
  %374 = vmatpush1.msra.mxu0 0.0
  %375 = vmatprep.subr.mxu0 0.0
  %376 = vmatpush1.msra.mxu0 0.0
  %377 = vmatprep.mubr.f32.mxu0 0.0
  %378 = vmatmul.mubr.f32.gmra.mrb[0].mxu0 %v311
  %v379 = vpop.f32.mrb[0].mxu0
  %v380 = vadd.f32 0.0, %v379
  %v381 = vpop.f32.mrb[0].mxu0
  %382 = vdwg.mxu0
  %v383 = vadd.f32 %v173, %v380
  %v384 = vxor.u32 %v383, 2147483648
  %v385 = vmul.f32 %v384, 1.442695
  %v386 = vpow.pop %v385
  %v387 = vadd.f32 %v386, 1.0
  %v388 = vrcp.pop %v387
  %v389 = vmul.f32 1.0, %v388
  %v390 = vadd.f32 %v380, %v286
  %392 = vrot.lane.b32.xlu0 %v390, 64
  %v393 = vpop.permute.xlu0 %392
  %v395 = vmul.f32 %v389, %v393
  %397 = vrot.lane.b32.xlu0 %v395, 64
  %v398 = vpop.permute.xlu0 %397
  %v400 = vadd.f32 %v173, %v398
  %v401 = vtanh.pop %v400
  %v402 = vsub.f32 1.0, %v389
  %404 = vrot.lane.b32.xlu0 %v401, 96
  %v405 = vpop.permute.xlu0 %404
  %v407 = vmul.f32 %v402, %v405
  %v408 = vmul.f32 %v389, %v307
  %v409 = vadd.f32 %v407, %v408
  %411 = vrot.lane.b32.xlu0 %v409, 96
  %v412 = vpop.permute.xlu0 %411
  %v413 = vsel %vm204, %v412, 0
  %415 = vmatprep.subr.mxu0 0.0
  %416 = vmatpush1.msra.mxu0 %v29
  %417 = vmatprep.subr.mxu0 0.0
  %418 = vmatpush1.msra.mxu0 %v30
  %419 = vmatprep.subr.mxu0 0.0
  %420 = vmatpush1.msra.mxu0 %v31
  %421 = vmatprep.subr.mxu0 0.0
  %422 = vmatpush1.msra.mxu0 %v32
  %423 = vmatprep.subr.mxu0 0.0
  %424 = vmatpush1.msra.mxu0 0.0
  %425 = vmatprep.subr.mxu0 0.0
  %426 = vmatpush1.msra.mxu0 0.0
  %427 = vmatprep.subr.mxu0 0.0
  %428 = vmatpush1.msra.mxu0 0.0
  %429 = vmatprep.subr.mxu0 0.0
  %430 = vmatpush1.msra.mxu0 0.0
  %431 = vmatprep.subr.mxu0 0.0
  %432 = vmatpush1.msra.mxu0 0.0
  %433 = vmatprep.subr.mxu0 0.0
  %434 = vmatpush1.msra.mxu0 0.0
  %435 = vmatprep.subr.mxu0 0.0
  %436 = vmatpush1.msra.mxu0 0.0
  %437 = vmatprep.subr.mxu0 0.0
  %438 = vmatpush1.msra.mxu0 0.0
  %439 = vmatprep.subr.mxu0 0.0
  %440 = vmatpush1.msra.mxu0 0.0
  %441 = vmatprep.subr.mxu0 0.0
  %442 = vmatpush1.msra.mxu0 0.0
  %443 = vmatprep.subr.mxu0 0.0
  %444 = vmatpush1.msra.mxu0 0.0
  %445 = vmatprep.subr.mxu0 0.0
  %446 = vmatpush1.msra.mxu0 0.0
  %447 = vmatprep.subr.mxu0 0.0
  %448 = vmatpush1.msra.mxu0 0.0
  %449 = vmatprep.subr.mxu0 0.0
  %450 = vmatpush1.msra.mxu0 0.0
  %451 = vmatprep.subr.mxu0 0.0
  %452 = vmatpush1.msra.mxu0 0.0
  %453 = vmatprep.subr.mxu0 0.0
  %454 = vmatpush1.msra.mxu0 0.0
  %455 = vmatprep.subr.mxu0 0.0
  %456 = vmatpush1.msra.mxu0 0.0
  %457 = vmatprep.subr.mxu0 0.0
  %458 = vmatpush1.msra.mxu0 0.0
  %459 = vmatprep.subr.mxu0 0.0
  %460 = vmatpush1.msra.mxu0 0.0
  %461 = vmatprep.subr.mxu0 0.0
  %462 = vmatpush1.msra.mxu0 0.0
  %463 = vmatprep.subr.mxu0 0.0
  %464 = vmatpush1.msra.mxu0 0.0
  %465 = vmatprep.subr.mxu0 0.0
  %466 = vmatpush1.msra.mxu0 0.0
  %467 = vmatprep.subr.mxu0 0.0
  %468 = vmatpush1.msra.mxu0 0.0
  %469 = vmatprep.subr.mxu0 0.0
  %470 = vmatpush1.msra.mxu0 0.0
  %471 = vmatprep.subr.mxu0 0.0
  %472 = vmatpush1.msra.mxu0 0.0
  %473 = vmatprep.subr.mxu0 0.0
  %474 = vmatpush1.msra.mxu0 0.0
  %475 = vmatprep.subr.mxu0 0.0
  %476 = vmatpush1.msra.mxu0 0.0
  %477 = vmatprep.subr.mxu0 0.0
  %478 = vmatpush1.msra.mxu0 0.0
  %479 = vmatprep.mubr.f32.mxu0 0.0
  %480 = vmatmul.mubr.f32.gmra.mrb[0].mxu0 %v413
  %v481 = vpop.f32.mrb[0].mxu0
  %v482 = vadd.f32 0.0, %v481
  %v483 = vpop.f32.mrb[0].mxu0
  %484 = vdwg.mxu0
  %v485 = vadd.f32 %v178, %v482
  %v486 = vxor.u32 %v485, 2147483648
  %v487 = vmul.f32 %v486, 1.442695
  %v488 = vpow.pop %v487
  %v489 = vadd.f32 %v488, 1.0
  %v490 = vrcp.pop %v489
  %v491 = vmul.f32 1.0, %v490
  %v492 = vadd.f32 %v482, %v286
  %494 = vrot.lane.b32.xlu0 %v492, 64
  %v495 = vpop.permute.xlu0 %494
  %v497 = vmul.f32 %v491, %v495
  %499 = vrot.lane.b32.xlu0 %v497, 64
  %v500 = vpop.permute.xlu0 %499
  %v502 = vadd.f32 %v178, %v500
  %v503 = vtanh.pop %v502
  %v504 = vsub.f32 1.0, %v491
  %506 = vrot.lane.b32.xlu0 %v503, 96
  %v507 = vpop.permute.xlu0 %506
  %v509 = vmul.f32 %v504, %v507
  %v510 = vmul.f32 %v491, %v409
  %v511 = vadd.f32 %v509, %v510
  %513 = vrot.lane.b32.xlu0 %v511, 96
  %v514 = vpop.permute.xlu0 %513
  %v515 = vsel %vm204, %v514, 0
  %517 = vmatprep.subr.mxu0 0.0
  %518 = vmatpush1.msra.mxu0 %v29
  %519 = vmatprep.subr.mxu0 0.0
  %520 = vmatpush1.msra.mxu0 %v30
  %521 = vmatprep.subr.mxu0 0.0
  %522 = vmatpush1.msra.mxu0 %v31
  %523 = vmatprep.subr.mxu0 0.0
  %524 = vmatpush1.msra.mxu0 %v32
  %525 = vmatprep.subr.mxu0 0.0
  %526 = vmatpush1.msra.mxu0 0.0
  %527 = vmatprep.subr.mxu0 0.0
  %528 = vmatpush1.msra.mxu0 0.0
  %529 = vmatprep.subr.mxu0 0.0
  %530 = vmatpush1.msra.mxu0 0.0
  %531 = vmatprep.subr.mxu0 0.0
  %532 = vmatpush1.msra.mxu0 0.0
  %533 = vmatprep.subr.mxu0 0.0
  %534 = vmatpush1.msra.mxu0 0.0
  %535 = vmatprep.subr.mxu0 0.0
  %536 = vmatpush1.msra.mxu0 0.0
  %537 = vmatprep.subr.mxu0 0.0
  %538 = vmatpush1.msra.mxu0 0.0
  %539 = vmatprep.subr.mxu0 0.0
  %540 = vmatpush1.msra.mxu0 0.0
  %541 = vmatprep.subr.mxu0 0.0
  %542 = vmatpush1.msra.mxu0 0.0
  %543 = vmatprep.subr.mxu0 0.0
  %544 = vmatpush1.msra.mxu0 0.0
  %545 = vmatprep.subr.mxu0 0.0
  %546 = vmatpush1.msra.mxu0 0.0
  %547 = vmatprep.subr.mxu0 0.0
  %548 = vmatpush1.msra.mxu0 0.0
  %549 = vmatprep.subr.mxu0 0.0
  %550 = vmatpush1.msra.mxu0 0.0
  %551 = vmatprep.subr.mxu0 0.0
  %552 = vmatpush1.msra.mxu0 0.0
  %553 = vmatprep.subr.mxu0 0.0
  %554 = vmatpush1.msra.mxu0 0.0
  %555 = vmatprep.subr.mxu0 0.0
  %556 = vmatpush1.msra.mxu0 0.0
  %557 = vmatprep.subr.mxu0 0.0
  %558 = vmatpush1.msra.mxu0 0.0
  %559 = vmatprep.subr.mxu0 0.0
  %560 = vmatpush1.msra.mxu0 0.0
  %561 = vmatprep.subr.mxu0 0.0
  %562 = vmatpush1.msra.mxu0 0.0
  %563 = vmatprep.subr.mxu0 0.0
  %564 = vmatpush1.msra.mxu0 0.0
  %565 = vmatprep.subr.mxu0 0.0
  %566 = vmatpush1.msra.mxu0 0.0
  %567 = vmatprep.subr.mxu0 0.0
  %568 = vmatpush1.msra.mxu0 0.0
  %569 = vmatprep.subr.mxu0 0.0
  %570 = vmatpush1.msra.mxu0 0.0
  %571 = vmatprep.subr.mxu0 0.0
  %572 = vmatpush1.msra.mxu0 0.0
  %573 = vmatprep.subr.mxu0 0.0
  %574 = vmatpush1.msra.mxu0 0.0
  %575 = vmatprep.subr.mxu0 0.0
  %576 = vmatpush1.msra.mxu0 0.0
  %577 = vmatprep.subr.mxu0 0.0
  %578 = vmatpush1.msra.mxu0 0.0
  %579 = vmatprep.subr.mxu0 0.0
  %580 = vmatpush1.msra.mxu0 0.0
  %581 = vmatprep.mubr.f32.mxu0 0.0
  %582 = vmatmul.mubr.f32.gmra.mrb[0].mxu0 %v515
  %v583 = vpop.f32.mrb[0].mxu0
  %v584 = vadd.f32 0.0, %v583
  %v585 = vpop.f32.mrb[0].mxu0
  %586 = vdwg.mxu0
  %v587 = vadd.f32 %v183, %v584
  %v588 = vxor.u32 %v587, 2147483648
  %v589 = vmul.f32 %v588, 1.442695
  %v590 = vpow.pop %v589
  %v591 = vadd.f32 %v590, 1.0
  %v592 = vrcp.pop %v591
  %v593 = vmul.f32 1.0, %v592
  %v594 = vadd.f32 %v584, %v286
  %596 = vrot.lane.b32.xlu0 %v594, 64
  %v597 = vpop.permute.xlu0 %596
  %v599 = vmul.f32 %v593, %v597
  %601 = vrot.lane.b32.xlu0 %v599, 64
  %v602 = vpop.permute.xlu0 %601
  %v604 = vadd.f32 %v183, %v602
  %v605 = vtanh.pop %v604
  %v606 = vsub.f32 1.0, %v593
  %608 = vrot.lane.b32.xlu0 %v605, 96
  %v609 = vpop.permute.xlu0 %608
  %v611 = vmul.f32 %v606, %v609
  %v612 = vmul.f32 %v593, %v511
  %v613 = vadd.f32 %v611, %v612
  %615 = vrot.lane.b32.xlu0 %v613, 96
  %v616 = vpop.permute.xlu0 %615
  %v617 = vsel %vm204, %v616, 0
  %619 = vmatprep.subr.mxu0 0.0
  %620 = vmatpush1.msra.mxu0 %v29
  %621 = vmatprep.subr.mxu0 0.0
  %622 = vmatpush1.msra.mxu0 %v30
  %623 = vmatprep.subr.mxu0 0.0
  %624 = vmatpush1.msra.mxu0 %v31
  %625 = vmatprep.subr.mxu0 0.0
  %626 = vmatpush1.msra.mxu0 %v32
  %627 = vmatprep.subr.mxu0 0.0
  %628 = vmatpush1.msra.mxu0 0.0
  %629 = vmatprep.subr.mxu0 0.0
  %630 = vmatpush1.msra.mxu0 0.0
  %631 = vmatprep.subr.mxu0 0.0
  %632 = vmatpush1.msra.mxu0 0.0
  %633 = vmatprep.subr.mxu0 0.0
  %634 = vmatpush1.msra.mxu0 0.0
  %635 = vmatprep.subr.mxu0 0.0
  %636 = vmatpush1.msra.mxu0 0.0
  %637 = vmatprep.subr.mxu0 0.0
  %638 = vmatpush1.msra.mxu0 0.0
  %639 = vmatprep.subr.mxu0 0.0
  %640 = vmatpush1.msra.mxu0 0.0
  %641 = vmatprep.subr.mxu0 0.0
  %642 = vmatpush1.msra.mxu0 0.0
  %643 = vmatprep.subr.mxu0 0.0
  %644 = vmatpush1.msra.mxu0 0.0
  %645 = vmatprep.subr.mxu0 0.0
  %646 = vmatpush1.msra.mxu0 0.0
  %647 = vmatprep.subr.mxu0 0.0
  %648 = vmatpush1.msra.mxu0 0.0
  %649 = vmatprep.subr.mxu0 0.0
  %650 = vmatpush1.msra.mxu0 0.0
  %651 = vmatprep.subr.mxu0 0.0
  %652 = vmatpush1.msra.mxu0 0.0
  %653 = vmatprep.subr.mxu0 0.0
  %654 = vmatpush1.msra.mxu0 0.0
  %655 = vmatprep.subr.mxu0 0.0
  %656 = vmatpush1.msra.mxu0 0.0
  %657 = vmatprep.subr.mxu0 0.0
  %658 = vmatpush1.msra.mxu0 0.0
  %659 = vmatprep.subr.mxu0 0.0
  %660 = vmatpush1.msra.mxu0 0.0
  %661 = vmatprep.subr.mxu0 0.0
  %662 = vmatpush1.msra.mxu0 0.0
  %663 = vmatprep.subr.mxu0 0.0
  %664 = vmatpush1.msra.mxu0 0.0
  %665 = vmatprep.subr.mxu0 0.0
  %666 = vmatpush1.msra.mxu0 0.0
  %667 = vmatprep.subr.mxu0 0.0
  %668 = vmatpush1.msra.mxu0 0.0
  %669 = vmatprep.subr.mxu0 0.0
  %670 = vmatpush1.msra.mxu0 0.0
  %671 = vmatprep.subr.mxu0 0.0
  %672 = vmatpush1.msra.mxu0 0.0
  %673 = vmatprep.subr.mxu0 0.0
  %674 = vmatpush1.msra.mxu0 0.0
  %675 = vmatprep.subr.mxu0 0.0
  %676 = vmatpush1.msra.mxu0 0.0
  %677 = vmatprep.subr.mxu0 0.0
  %678 = vmatpush1.msra.mxu0 0.0
  %679 = vmatprep.subr.mxu0 0.0
  %680 = vmatpush1.msra.mxu0 0.0
  %681 = vmatprep.subr.mxu0 0.0
  %682 = vmatpush1.msra.mxu0 0.0
  %683 = vmatprep.mubr.f32.mxu0 0.0
  %684 = vmatmul.mubr.f32.gmra.mrb[0].mxu0 %v617
  %v685 = vpop.f32.mrb[0].mxu0
  %v686 = vadd.f32 0.0, %v685
  %v687 = vpop.f32.mrb[0].mxu0
  %688 = vdwg.mxu0
  %v689 = vadd.f32 %v188, %v686
  %v690 = vxor.u32 %v689, 2147483648
  %v691 = vmul.f32 %v690, 1.442695
  %v692 = vpow.pop %v691
  %v693 = vadd.f32 %v692, 1.0
  %v694 = vrcp.pop %v693
  %v695 = vmul.f32 1.0, %v694
  %v696 = vadd.f32 %v686, %v286
  %698 = vrot.lane.b32.xlu0 %v696, 64
  %v699 = vpop.permute.xlu0 %698
  %v701 = vmul.f32 %v695, %v699
  %703 = vrot.lane.b32.xlu0 %v701, 64
  %v704 = vpop.permute.xlu0 %703
  %v706 = vadd.f32 %v188, %v704
  %v707 = vtanh.pop %v706
  %v708 = vsub.f32 1.0, %v695
  %710 = vrot.lane.b32.xlu0 %v707, 96
  %v711 = vpop.permute.xlu0 %710
  %v713 = vmul.f32 %v708, %v711
  %v714 = vmul.f32 %v695, %v613
  %v715 = vadd.f32 %v713, %v714
  %717 = vrot.lane.b32.xlu0 %v715, 96
  %v718 = vpop.permute.xlu0 %717
  %v719 = vsel %vm204, %v718, 0
  %721 = vmatprep.subr.mxu0 0.0
  %722 = vmatpush1.msra.mxu0 %v29
  %723 = vmatprep.subr.mxu0 0.0
  %724 = vmatpush1.msra.mxu0 %v30
  %725 = vmatprep.subr.mxu0 0.0
  %726 = vmatpush1.msra.mxu0 %v31
  %727 = vmatprep.subr.mxu0 0.0
  %728 = vmatpush1.msra.mxu0 %v32
  %729 = vmatprep.subr.mxu0 0.0
  %730 = vmatpush1.msra.mxu0 0.0
  %731 = vmatprep.subr.mxu0 0.0
  %732 = vmatpush1.msra.mxu0 0.0
  %733 = vmatprep.subr.mxu0 0.0
  %734 = vmatpush1.msra.mxu0 0.0
  %735 = vmatprep.subr.mxu0 0.0
  %736 = vmatpush1.msra.mxu0 0.0
  %737 = vmatprep.subr.mxu0 0.0
  %738 = vmatpush1.msra.mxu0 0.0
  %739 = vmatprep.subr.mxu0 0.0
  %740 = vmatpush1.msra.mxu0 0.0
  %741 = vmatprep.subr.mxu0 0.0
  %742 = vmatpush1.msra.mxu0 0.0
  %743 = vmatprep.subr.mxu0 0.0
  %744 = vmatpush1.msra.mxu0 0.0
  %745 = vmatprep.subr.mxu0 0.0
  %746 = vmatpush1.msra.mxu0 0.0
  %747 = vmatprep.subr.mxu0 0.0
  %748 = vmatpush1.msra.mxu0 0.0
  %749 = vmatprep.subr.mxu0 0.0
  %750 = vmatpush1.msra.mxu0 0.0
  %751 = vmatprep.subr.mxu0 0.0
  %752 = vmatpush1.msra.mxu0 0.0
  %753 = vmatprep.subr.mxu0 0.0
  %754 = vmatpush1.msra.mxu0 0.0
  %755 = vmatprep.subr.mxu0 0.0
  %756 = vmatpush1.msra.mxu0 0.0
  %757 = vmatprep.subr.mxu0 0.0
  %758 = vmatpush1.msra.mxu0 0.0
  %759 = vmatprep.subr.mxu0 0.0
  %760 = vmatpush1.msra.mxu0 0.0
  %761 = vmatprep.subr.mxu0 0.0
  %762 = vmatpush1.msra.mxu0 0.0
  %763 = vmatprep.subr.mxu0 0.0
  %764 = vmatpush1.msra.mxu0 0.0
  %765 = vmatprep.subr.mxu0 0.0
  %766 = vmatpush1.msra.mxu0 0.0
  %767 = vmatprep.subr.mxu0 0.0
  %768 = vmatpush1.msra.mxu0 0.0
  %769 = vmatprep.subr.mxu0 0.0
  %770 = vmatpush1.msra.mxu0 0.0
  %771 = vmatprep.subr.mxu0 0.0
  %772 = vmatpush1.msra.mxu0 0.0
  %773 = vmatprep.subr.mxu0 0.0
  %774 = vmatpush1.msra.mxu0 0.0
  %775 = vmatprep.subr.mxu0 0.0
  %776 = vmatpush1.msra.mxu0 0.0
  %777 = vmatprep.subr.mxu0 0.0
  %778 = vmatpush1.msra.mxu0 0.0
  %779 = vmatprep.subr.mxu0 0.0
  %780 = vmatpush1.msra.mxu0 0.0
  %781 = vmatprep.subr.mxu0 0.0
  %782 = vmatpush1.msra.mxu0 0.0
  %783 = vmatprep.subr.mxu0 0.0
  %784 = vmatpush1.msra.mxu0 0.0
  %785 = vmatprep.mubr.f32.mxu0 0.0
  %786 = vmatmul.mubr.f32.gmra.mrb[0].mxu0 %v719
  %v787 = vpop.f32.mrb[0].mxu0
  %v788 = vadd.f32 0.0, %v787
  %v789 = vpop.f32.mrb[0].mxu0
  %790 = vdwg.mxu0
  %v791 = vadd.f32 %v193, %v788
  %v792 = vxor.u32 %v791, 2147483648
  %v793 = vmul.f32 %v792, 1.442695
  %v794 = vpow.pop %v793
  %v795 = vadd.f32 %v794, 1.0
  %v796 = vrcp.pop %v795
  %v797 = vmul.f32 1.0, %v796
  %v798 = vadd.f32 %v788, %v286
  %800 = vrot.lane.b32.xlu0 %v798, 64
  %v801 = vpop.permute.xlu0 %800
  %v803 = vmul.f32 %v797, %v801
  %805 = vrot.lane.b32.xlu0 %v803, 64
  %v806 = vpop.permute.xlu0 %805
  %v808 = vadd.f32 %v193, %v806
  %v809 = vtanh.pop %v808
  %v810 = vsub.f32 1.0, %v797
  %812 = vrot.lane.b32.xlu0 %v809, 96
  %v813 = vpop.permute.xlu0 %812
  %v815 = vmul.f32 %v810, %v813
  %v816 = vmul.f32 %v797, %v715
  %v817 = vadd.f32 %v815, %v816
  %819 = vrot.lane.b32.xlu0 %v817, 96
  %v820 = vpop.permute.xlu0 %819
  %v821 = vsel %vm204, %v820, 0
  %823 = vmatprep.subr.mxu0 0.0
  %824 = vmatpush1.msra.mxu0 %v29
  %825 = vmatprep.subr.mxu0 0.0
  %826 = vmatpush1.msra.mxu0 %v30
  %827 = vmatprep.subr.mxu0 0.0
  %828 = vmatpush1.msra.mxu0 %v31
  %829 = vmatprep.subr.mxu0 0.0
  %830 = vmatpush1.msra.mxu0 %v32
  %831 = vmatprep.subr.mxu0 0.0
  %832 = vmatpush1.msra.mxu0 0.0
  %833 = vmatprep.subr.mxu0 0.0
  %834 = vmatpush1.msra.mxu0 0.0
  %835 = vmatprep.subr.mxu0 0.0
  %836 = vmatpush1.msra.mxu0 0.0
  %837 = vmatprep.subr.mxu0 0.0
  %838 = vmatpush1.msra.mxu0 0.0
  %839 = vmatprep.subr.mxu0 0.0
  %840 = vmatpush1.msra.mxu0 0.0
  %841 = vmatprep.subr.mxu0 0.0
  %842 = vmatpush1.msra.mxu0 0.0
  %843 = vmatprep.subr.mxu0 0.0
  %844 = vmatpush1.msra.mxu0 0.0
  %845 = vmatprep.subr.mxu0 0.0
  %846 = vmatpush1.msra.mxu0 0.0
  %847 = vmatprep.subr.mxu0 0.0
  %848 = vmatpush1.msra.mxu0 0.0
  %849 = vmatprep.subr.mxu0 0.0
  %850 = vmatpush1.msra.mxu0 0.0
  %851 = vmatprep.subr.mxu0 0.0
  %852 = vmatpush1.msra.mxu0 0.0
  %853 = vmatprep.subr.mxu0 0.0
  %854 = vmatpush1.msra.mxu0 0.0
  %855 = vmatprep.subr.mxu0 0.0
  %856 = vmatpush1.msra.mxu0 0.0
  %857 = vmatprep.subr.mxu0 0.0
  %858 = vmatpush1.msra.mxu0 0.0
  %859 = vmatprep.subr.mxu0 0.0
  %860 = vmatpush1.msra.mxu0 0.0
  %861 = vmatprep.subr.mxu0 0.0
  %862 = vmatpush1.msra.mxu0 0.0
  %863 = vmatprep.subr.mxu0 0.0
  %864 = vmatpush1.msra.mxu0 0.0
  %865 = vmatprep.subr.mxu0 0.0
  %866 = vmatpush1.msra.mxu0 0.0
  %867 = vmatprep.subr.mxu0 0.0
  %868 = vmatpush1.msra.mxu0 0.0
  %869 = vmatprep.subr.mxu0 0.0
  %870 = vmatpush1.msra.mxu0 0.0
  %871 = vmatprep.subr.mxu0 0.0
  %872 = vmatpush1.msra.mxu0 0.0
  %873 = vmatprep.subr.mxu0 0.0
  %874 = vmatpush1.msra.mxu0 0.0
  %875 = vmatprep.subr.mxu0 0.0
  %876 = vmatpush1.msra.mxu0 0.0
  %877 = vmatprep.subr.mxu0 0.0
  %878 = vmatpush1.msra.mxu0 0.0
  %879 = vmatprep.subr.mxu0 0.0
  %880 = vmatpush1.msra.mxu0 0.0
  %881 = vmatprep.subr.mxu0 0.0
  %882 = vmatpush1.msra.mxu0 0.0
  %883 = vmatprep.subr.mxu0 0.0
  %884 = vmatpush1.msra.mxu0 0.0
  %885 = vmatprep.subr.mxu0 0.0
  %886 = vmatpush1.msra.mxu0 0.0
  %887 = vmatprep.mubr.f32.mxu0 0.0
  %888 = vmatmul.mubr.f32.gmra.mrb[0].mxu0 %v821
  %v889 = vpop.f32.mrb[0].mxu0
  %v890 = vadd.f32 0.0, %v889
  %v891 = vpop.f32.mrb[0].mxu0
  %892 = vdwg.mxu0
  %v893 = vadd.f32 %v198, %v890
  %v894 = vxor.u32 %v893, 2147483648
  %v895 = vmul.f32 %v894, 1.442695
  %v896 = vpow.pop %v895
  %v897 = vadd.f32 %v896, 1.0
  %v898 = vrcp.pop %v897
  %v899 = vmul.f32 1.0, %v898
  %v900 = vadd.f32 %v890, %v286
  %902 = vrot.lane.b32.xlu0 %v900, 64
  %v903 = vpop.permute.xlu0 %902
  %v905 = vmul.f32 %v899, %v903
  %907 = vrot.lane.b32.xlu0 %v905, 64
  %v908 = vpop.permute.xlu0 %907
  %v910 = vadd.f32 %v198, %v908
  %v911 = vtanh.pop %v910
  %v912 = vsub.f32 1.0, %v899
  %914 = vrot.lane.b32.xlu0 %v911, 96
  %v915 = vpop.permute.xlu0 %914
  %v917 = vmul.f32 %v912, %v915
  %v918 = vmul.f32 %v899, %v817
  %v919 = vadd.f32 %v917, %v918
  %921 = vrot.lane.b32.xlu0 %v919, 96
  %v922 = vpop.permute.xlu0 %921
  %v923 = vsel %vm204, %v922, 0
  %925 = vmatprep.subr.mxu0 0.0
  %926 = vmatpush1.msra.mxu0 %v29
  %927 = vmatprep.subr.mxu0 0.0
  %928 = vmatpush1.msra.mxu0 %v30
  %929 = vmatprep.subr.mxu0 0.0
  %930 = vmatpush1.msra.mxu0 %v31
  %931 = vmatprep.subr.mxu0 0.0
  %932 = vmatpush1.msra.mxu0 %v32
  %933 = vmatprep.subr.mxu0 0.0
  %934 = vmatpush1.msra.mxu0 0.0
  %935 = vmatprep.subr.mxu0 0.0
  %936 = vmatpush1.msra.mxu0 0.0
  %937 = vmatprep.subr.mxu0 0.0
  %938 = vmatpush1.msra.mxu0 0.0
  %939 = vmatprep.subr.mxu0 0.0
  %940 = vmatpush1.msra.mxu0 0.0
  %941 = vmatprep.subr.mxu0 0.0
  %942 = vmatpush1.msra.mxu0 0.0
  %943 = vmatprep.subr.mxu0 0.0
  %944 = vmatpush1.msra.mxu0 0.0
  %945 = vmatprep.subr.mxu0 0.0
  %946 = vmatpush1.msra.mxu0 0.0
  %947 = vmatprep.subr.mxu0 0.0
  %948 = vmatpush1.msra.mxu0 0.0
  %949 = vmatprep.subr.mxu0 0.0
  %950 = vmatpush1.msra.mxu0 0.0
  %951 = vmatprep.subr.mxu0 0.0
  %952 = vmatpush1.msra.mxu0 0.0
  %953 = vmatprep.subr.mxu0 0.0
  %954 = vmatpush1.msra.mxu0 0.0
  %955 = vmatprep.subr.mxu0 0.0
  %956 = vmatpush1.msra.mxu0 0.0
  %957 = vmatprep.subr.mxu0 0.0
  %958 = vmatpush1.msra.mxu0 0.0
  %959 = vmatprep.subr.mxu0 0.0
  %960 = vmatpush1.msra.mxu0 0.0
  %961 = vmatprep.subr.mxu0 0.0
  %962 = vmatpush1.msra.mxu0 0.0
  %963 = vmatprep.subr.mxu0 0.0
  %964 = vmatpush1.msra.mxu0 0.0
  %965 = vmatprep.subr.mxu0 0.0
  %966 = vmatpush1.msra.mxu0 0.0
  %967 = vmatprep.subr.mxu0 0.0
  %968 = vmatpush1.msra.mxu0 0.0
  %969 = vmatprep.subr.mxu0 0.0
  %970 = vmatpush1.msra.mxu0 0.0
  %971 = vmatprep.subr.mxu0 0.0
  %972 = vmatpush1.msra.mxu0 0.0
  %973 = vmatprep.subr.mxu0 0.0
  %974 = vmatpush1.msra.mxu0 0.0
  %975 = vmatprep.subr.mxu0 0.0
  %976 = vmatpush1.msra.mxu0 0.0
  %977 = vmatprep.subr.mxu0 0.0
  %978 = vmatpush1.msra.mxu0 0.0
  %979 = vmatprep.subr.mxu0 0.0
  %980 = vmatpush1.msra.mxu0 0.0
  %981 = vmatprep.subr.mxu0 0.0
  %982 = vmatpush1.msra.mxu0 0.0
  %983 = vmatprep.subr.mxu0 0.0
  %984 = vmatpush1.msra.mxu0 0.0
  %985 = vmatprep.subr.mxu0 0.0
  %986 = vmatpush1.msra.mxu0 0.0
  %987 = vmatprep.subr.mxu0 0.0
  %988 = vmatpush1.msra.mxu0 0.0
  %989 = vmatprep.mubr.f32.mxu0 0.0
  %990 = vmatmul.mubr.f32.gmra.mrb[0].mxu0 %v923
  %v991 = vpop.f32.mrb[0].mxu0
  %v992 = vadd.f32 0.0, %v991
  %v993 = vpop.f32.mrb[0].mxu0
  %994 = vdwg.mxu0
  %v995 = vadd.f32 %v203, %v992
  %v996 = vxor.u32 %v995, 2147483648
  %v997 = vmul.f32 %v996, 1.442695
  %v998 = vpow.pop %v997
  %v999 = vadd.f32 %v998, 1.0
  %v1000 = vrcp.pop %v999
  %v1001 = vmul.f32 1.0, %v1000
  %v1002 = vadd.f32 %v992, %v286
  %1004 = vrot.lane.b32.xlu0 %v1002, 64
  %v1005 = vpop.permute.xlu0 %1004
  %v1007 = vmul.f32 %v1001, %v1005
  %1009 = vrot.lane.b32.xlu0 %v1007, 64
  %v1010 = vpop.permute.xlu0 %1009
  %v1012 = vadd.f32 %v203, %v1010
  %v1013 = vtanh.pop %v1012
  %v1014 = vsub.f32 1.0, %v1001
  %1016 = vrot.lane.b32.xlu0 %v1013, 96
  %v1017 = vpop.permute.xlu0 %1016
  %v1019 = vmul.f32 %v1014, %v1017
  %v1020 = vmul.f32 %v1001, %v919
  %v1021 = vadd.f32 %v1019, %v1020
  %1023 = vrot.lane.b32.xlu0 %v511, 32
  %v1024 = vpop.permute.xlu0 %1023
  %1026 = vrot.lane.b32.xlu0 %v613, 64
  %v1027 = vpop.permute.xlu0 %1026
  %1030 = vrot.lane.b32.xlu0 %v919, 32
  %v1031 = vpop.permute.xlu0 %1030
  %1034 = vrot.lane.b32.xlu0 %v1021, 64
  %v1035 = vpop.permute.xlu0 %1034
  %v1037 = vsel %vm204, %v310, %v409
  %vm1038 = vcmask 523264
  %v1039 = vsel %vm1038, %v1037, %v1024
  %vm1040 = vcmask 785408
  %v1041 = vsel %vm1040, %v1039, %v1027
  %v1042 = vsel %vm204, %v718, %v817
  %v1043 = vsel %vm1038, %v1042, %v1031
  %v1044 = vsel %vm1040, %v1043, %v1035
  %v1045 = vld [vmem:[%s4] sm:$0xff]
  %v1046 = vld [vmem:[%s4 + $0x8] sm:$0xff]
  %v1047 = vld [vmem:[%s4 + $0x10] sm:$0xff]
  %v1048 = vld [vmem:[%s4 + $0x18] sm:$0xff]
  %v1049 = vld [vmem:[%s4 + $0x20] sm:$0xff]
  %v1050 = vld [vmem:[%s4 + $0x28] sm:$0xff]
  %v1051 = vld [vmem:[%s4 + $0x30] sm:$0xff]
  %v1052 = vld [vmem:[%s4 + $0x38] sm:$0xff]
  %v1053 = vld [vmem:[%s4 + $0x40] sm:$0xff]
  %v1054 = vld [vmem:[%s4 + $0x48] sm:$0xff]
  %v1055 = vld [vmem:[%s4 + $0x50] sm:$0xff]
  %v1056 = vld [vmem:[%s4 + $0x58] sm:$0xff]
  %v1057 = vld [vmem:[%s4 + $0x60] sm:$0xff]
  %v1058 = vld [vmem:[%s4 + $0x68] sm:$0xff]
  %v1059 = vld [vmem:[%s4 + $0x70] sm:$0xff]
  %v1060 = vld [vmem:[%s4 + $0x78] sm:$0xff]
  %v1061 = vld [vmem:[%s4 + $0x80] sm:$0xff]
  %v1062 = vld [vmem:[%s4 + $0x88] sm:$0xff]
  %v1063 = vld [vmem:[%s4 + $0x90] sm:$0xff]
  %v1064 = vld [vmem:[%s4 + $0x98] sm:$0xff]
  %v1065 = vld [vmem:[%s4 + $0xa0] sm:$0xff]
  %v1066 = vld [vmem:[%s4 + $0xa8] sm:$0xff]
  %v1067 = vld [vmem:[%s4 + $0xb0] sm:$0xff]
  %v1068 = vld [vmem:[%s4 + $0xb8] sm:$0xff]
  %v1069 = vld [vmem:[%s4 + $0xc0] sm:$0xff]
  %v1070 = vld [vmem:[%s4 + $0xc8] sm:$0xff]
  %v1071 = vld [vmem:[%s4 + $0xd0] sm:$0xff]
  %v1072 = vld [vmem:[%s4 + $0xd8] sm:$0xff]
  %v1073 = vld [vmem:[%s4 + $0xe0] sm:$0xff]
  %v1074 = vld [vmem:[%s4 + $0xe8] sm:$0xff]
  %v1075 = vld [vmem:[%s4 + $0xf0] sm:$0xff]
  %v1076 = vld [vmem:[%s4 + $0xf8] sm:$0xff]
  %v1077 = vld [vmem:[%s5] sm:$0x1]
  %v1079 = vlaneseq
  %v1080 = vshrl.u32 %v1079, 7
  %v1081 = vsub.s32 0, %v1080
  %v1082 = vrot.slane %v1077, %v1081
  %1084 = vmatprep.subr.mxu0 0.0
  %1085 = vmatpush1.msra.mxu0 %v1045
  %1086 = vmatprep.subr.mxu0 0.0
  %1087 = vmatpush1.msra.mxu0 %v1046
  %1088 = vmatprep.subr.mxu0 0.0
  %1089 = vmatpush1.msra.mxu0 %v1047
  %1090 = vmatprep.subr.mxu0 0.0
  %1091 = vmatpush1.msra.mxu0 %v1048
  %1092 = vmatprep.subr.mxu0 0.0
  %1093 = vmatpush1.msra.mxu0 %v1049
  %1094 = vmatprep.subr.mxu0 0.0
  %1095 = vmatpush1.msra.mxu0 %v1050
  %1096 = vmatprep.subr.mxu0 0.0
  %1097 = vmatpush1.msra.mxu0 %v1051
  %1098 = vmatprep.subr.mxu0 0.0
  %1099 = vmatpush1.msra.mxu0 %v1052
  %1100 = vmatprep.subr.mxu0 0.0
  %1101 = vmatpush1.msra.mxu0 %v1053
  %1102 = vmatprep.subr.mxu0 0.0
  %1103 = vmatpush1.msra.mxu0 %v1054
  %1104 = vmatprep.subr.mxu0 0.0
  %1105 = vmatpush1.msra.mxu0 %v1055
  %1106 = vmatprep.subr.mxu0 0.0
  %1107 = vmatpush1.msra.mxu0 %v1056
  %1108 = vmatprep.subr.mxu0 0.0
  %1109 = vmatpush1.msra.mxu0 %v1057
  %1110 = vmatprep.subr.mxu0 0.0
  %1111 = vmatpush1.msra.mxu0 %v1058
  %1112 = vmatprep.subr.mxu0 0.0
  %1113 = vmatpush1.msra.mxu0 %v1059
  %1114 = vmatprep.subr.mxu0 0.0
  %1115 = vmatpush1.msra.mxu0 %v1060
  %1116 = vmatprep.subr.mxu0 0.0
  %1117 = vmatpush1.msra.mxu0 %v1061
  %1118 = vmatprep.subr.mxu0 0.0
  %1119 = vmatpush1.msra.mxu0 %v1062
  %1120 = vmatprep.subr.mxu0 0.0
  %1121 = vmatpush1.msra.mxu0 %v1063
  %1122 = vmatprep.subr.mxu0 0.0
  %1123 = vmatpush1.msra.mxu0 %v1064
  %1124 = vmatprep.subr.mxu0 0.0
  %1125 = vmatpush1.msra.mxu0 %v1065
  %1126 = vmatprep.subr.mxu0 0.0
  %1127 = vmatpush1.msra.mxu0 %v1066
  %1128 = vmatprep.subr.mxu0 0.0
  %1129 = vmatpush1.msra.mxu0 %v1067
  %1130 = vmatprep.subr.mxu0 0.0
  %1131 = vmatpush1.msra.mxu0 %v1068
  %1132 = vmatprep.subr.mxu0 0.0
  %1133 = vmatpush1.msra.mxu0 %v1069
  %1134 = vmatprep.subr.mxu0 0.0
  %1135 = vmatpush1.msra.mxu0 %v1070
  %1136 = vmatprep.subr.mxu0 0.0
  %1137 = vmatpush1.msra.mxu0 %v1071
  %1138 = vmatprep.subr.mxu0 0.0
  %1139 = vmatpush1.msra.mxu0 %v1072
  %1140 = vmatprep.subr.mxu0 0.0
  %1141 = vmatpush1.msra.mxu0 %v1073
  %1142 = vmatprep.subr.mxu0 0.0
  %1143 = vmatpush1.msra.mxu0 %v1074
  %1144 = vmatprep.subr.mxu0 0.0
  %1145 = vmatpush1.msra.mxu0 %v1075
  %1146 = vmatprep.subr.mxu0 0.0
  %1147 = vmatpush1.msra.mxu0 %v1076
  %1148 = vmatprep.mubr.f32.mxu0 %v1044
  %1149 = vmatmul.mubr.f32.gmra.mrb[0].mxu0 %v1041
  %v1150 = vpop.f32.mrb[0].mxu0
  %v1151 = vadd.f32 %v1082, %v1150
  %v1152 = vpop.f32.mrb[0].mxu0
  %1153 = vdwg.mxu0
  %vm1154 = vcmask 17408
  %1155 = vst.msk [vmem:[%s6] sm:$0x3] %vm1154, %v1151
  // Predicated region
  $region26: #{gru_module_forward.1} parent=0 // pred_check
    _
  $region27: #{gru_module_forward.1} parent=0 // pred_check_branch
    %1157 = sbr.rel (0) target = $region29
  $region28: #{gru_module_forward.1} parent=0 // pred_region
    _
  $region29: #{gru_module_forward.1} parent=0 // pred_fallthru
    _
  // Predicated region
  $region30: #{gru_module_forward.1} parent=0 // pred_check
    _
  $region31: #{gru_module_forward.1} parent=0 // pred_check_branch
    %1159 = sbr.rel (0) target = $region33
  $region32: #{gru_module_forward.1} parent=0 // pred_region
    _
  $region33: #{gru_module_forward.1} parent=0 // pred_fallthru
    _

</llo_original>
